<compile_context>
chip_gen: v5e
topology: v5e:2x2
jax: 0.10.0
libtpu: 0.0.40
codegen_flags: <defaults>
</compile_context>

<pallas_src>
import functools

import jax
import jax.numpy as jnp
from jax.experimental import pallas as pl
from jax.experimental.pallas import tpu as pltpu


def _round_up(x, m):
    return (x + m - 1) // m * m


# ----------------------------------------------------------------------------
# Pallas kernels
# ----------------------------------------------------------------------------
def _matmul_affine_kernel(x_ref, w_ref, scale_ref, bias_ref, o_ref, *, relu):
    """One fused conv tile: (TN, K) @ (K, Cout) + per-channel affine (+ReLU).

    x_ref:     (TN, K)     im2col slab tile (bf16), K = n_taps * Cin
    w_ref:     (K, Cout)   weight slab (bf16), broadcast across the grid
    scale_ref: (1, Cout)   folded BatchNorm scale (f32)
    bias_ref:  (1, Cout)   folded BatchNorm bias  (f32)
    o_ref:     (TN, Cout)
    """
    y = jnp.dot(x_ref[...], w_ref[...], preferred_element_type=jnp.float32)
    y = y * scale_ref[...] + bias_ref[...]
    if relu:
        y = jnp.maximum(y, 0.0)
    o_ref[...] = y.astype(o_ref.dtype)


def _softmax_depth_kernel(cost_ref, dv_ref, o_ref):
    """Softmax over depth planes + expected-depth regression (lane-dense).

    cost_ref: (1, D, THW) ; dv_ref: (1, D, 1) ; o_ref: (1, 1, THW)
    """
    c = cost_ref[...].astype(jnp.float32)
    m = jnp.max(c, axis=1, keepdims=True)
    e = jnp.exp(c - m)
    s = jnp.sum(e, axis=1, keepdims=True)
    p = e * pl.reciprocal(s, approx=True)          # prob_volume
    o_ref[...] = jnp.sum(p * dv_ref[...], axis=1, keepdims=True)


# ----------------------------------------------------------------------------
# pallas_call wrappers
# ----------------------------------------------------------------------------
_TILE_N = 1024  # spatial rows per tile (multiple of 128; <= ~3.5 MB/buffer bf16)


def _matmul_affine(slab, w, scale, bias, *, relu, out_dtype):
    """slab: (N, K) bf16 ; w: (K, Cout) bf16 ; scale/bias: (Cout,) f32."""
    n, k = slab.shape
    cout = w.shape[-1]
    tn = min(_TILE_N, _round_up(n, 8))
    n_pad = _round_up(n, tn)
    if n_pad != n:
        slab = jnp.pad(slab, ((0, n_pad - n), (0, 0)))
    sc = scale.reshape(1, cout).astype(jnp.float32)
    bi = bias.reshape(1, cout).astype(jnp.float32)
    kern = functools.partial(_matmul_affine_kernel, relu=relu)
    out = pl.pallas_call(
        kern,
        out_shape=jax.ShapeDtypeStruct((n_pad, cout), out_dtype),
        grid=(n_pad // tn,),
        in_specs=[
            pl.BlockSpec((tn, k), lambda i: (i, 0)),
            pl.BlockSpec((k, cout), lambda i: (0, 0)),
            pl.BlockSpec((1, cout), lambda i: (0, 0)),
            pl.BlockSpec((1, cout), lambda i: (0, 0)),
        ],
        out_specs=pl.BlockSpec((tn, cout), lambda i: (i, 0)),
        compiler_params=pltpu.CompilerParams(dimension_semantics=("parallel",)),
    )(slab, w, sc, bi)
    if n_pad != n:
        out = out[:n]
    return out


def conv3d_bn_relu(x, w, scale, bias, *, stride=1, relu=True,
                   out_dtype=jnp.bfloat16):
    """Conv3d(k=3, pad=1, stride, bias=False) + folded BN affine (+ReLU).

    x: (B, D, H, W, Cin) bf16 ; w: (3, 3, 3, Cin, Cout) ; scale/bias: (Cout,)
    The 27 taps are concatenated on the channel (lane) axis into one slab so
    the kernel does a single K = 27*Cin MXU contraction per tile.
    """
    b, d, h, wdim, cin = x.shape
    cout = w.shape[-1]
    do = (d - 1) // stride + 1
    ho = (h - 1) // stride + 1
    wo = (wdim - 1) // stride + 1
    xp = jnp.pad(x, ((0, 0), (1, 1), (1, 1), (1, 1), (0, 0)))
    views = []
    for kd in range(3):
        for kh in range(3):
            for kw in range(3):
                views.append(
                    xp[:, kd:kd + stride * (do - 1) + 1:stride,
                       kh:kh + stride * (ho - 1) + 1:stride,
                       kw:kw + stride * (wo - 1) + 1:stride, :])
    slab = jnp.concatenate(views, axis=-1).reshape(b * do * ho * wo, 27 * cin)
    w2 = w.reshape(27 * cin, cout).astype(jnp.bfloat16)
    y = _matmul_affine(slab, w2, scale, bias, relu=relu, out_dtype=out_dtype)
    return y.reshape(b, do, ho, wo, cout)


# Per-output-parity taps of a stride-2, k=3, pad=1, output_padding=1 transposed
# conv (1-D): even outputs use (input offset 0, kernel index 1); odd outputs use
# (offset 0, kernel 2) + (offset +1, kernel 0).  The 3-D kernel is the product.
_PHASE_TAPS = {0: ((0, 1),), 1: ((0, 2), (1, 0))}


def conv_transpose3d_bn_relu(x, w_t, scale, bias):
    """ConvTranspose3d(k=3, pad=1, stride=2, output_padding=1, bias=False)+BN+ReLU.

    Sub-pixel decomposition: 8 phase convolutions on the un-dilated input (no
    multiplies by inserted zeros), interleaved into the (2D, 2H, 2W) output.
    x: (B, D, H, W, Cin) bf16 ; w_t: PyTorch layout (Cin, Cout, 3, 3, 3).
    """
    b, d, h, wdim, cin = x.shape
    cout = w_t.shape[1]
    xp = jnp.pad(x, ((0, 0), (0, 1), (0, 1), (0, 1), (0, 0)))
    phase_outs = []
    for pd in (0, 1):
        for ph in (0, 1):
            for pw in (0, 1):
                views, wrows = [], []
                for od, kd in _PHASE_TAPS[pd]:
                    for oh, kh in _PHASE_TAPS[ph]:
                        for ow, kw in _PHASE_TAPS[pw]:
                            views.append(xp[:, od:od + d, oh:oh + h,
                                            ow:ow + wdim, :])
                            wrows.append(w_t[:, :, kd, kh, kw])   # (Cin, Cout)
                ntaps = len(views)
                slab = jnp.concatenate(views, axis=-1).reshape(
                    b * d * h * wdim, ntaps * cin)
                wk = jnp.concatenate(wrows, axis=0).astype(jnp.bfloat16)
                y = _matmul_affine(slab, wk, scale, bias, relu=True,
                                   out_dtype=jnp.bfloat16)
                phase_outs.append(y.reshape(b, d, h, wdim, cout))
    # Interleave the 8 phases: out[:, 2u+pd, 2v+ph, 2w+pw] = phase[pd,ph,pw][u,v,w]
    pstack = jnp.stack(phase_outs, axis=0).reshape(2, 2, 2, b, d, h, wdim, cout)
    out = jnp.transpose(pstack, (3, 4, 0, 5, 1, 6, 2, 7))
    return out.reshape(b, 2 * d, 2 * h, 2 * wdim, cout)


def softmax_depth_regression(cost, depth_values):
    """cost: (B, D, H, W) f32 ; depth_values: (B, D) -> depth: (B, H, W)."""
    b, d, h, w = cost.shape
    hw = h * w
    thw = hw if hw <= 4096 else 2048
    hw_pad = _round_up(hw, thw)
    c = cost.reshape(b, d, hw).astype(jnp.float32)
    if hw_pad != hw:
        c = jnp.pad(c, ((0, 0), (0, 0), (0, hw_pad - hw)))
    dv = depth_values.reshape(b, d, 1).astype(jnp.float32)
    out = pl.pallas_call(
        _softmax_depth_kernel,
        out_shape=jax.ShapeDtypeStruct((b, 1, hw_pad), jnp.float32),
        grid=(b, hw_pad // thw),
        in_specs=[
            pl.BlockSpec((1, d, thw), lambda i, j: (i, 0, j)),
            pl.BlockSpec((1, d, 1), lambda i, j: (i, 0, 0)),
        ],
        out_specs=pl.BlockSpec((1, 1, thw), lambda i, j: (i, 0, j)),
        compiler_params=pltpu.CompilerParams(
            dimension_semantics=("parallel", "parallel")),
    )(c, dv)
    return out[:, 0, :hw].reshape(b, h, w)


# ----------------------------------------------------------------------------
# Parameters + full forward (CostRegNet(num_channels=1) inside VolumeConvNet)
# ----------------------------------------------------------------------------
_BN_EPS = 1e-5
# (cin, cout, stride) for the 7 down ConvBnReLU3D layers; layer_channels = [8,16,32,64]
_DOWN_SPECS = [(1, 8, 1), (8, 16, 2), (16, 16, 1), (16, 32, 2),
               (32, 32, 1), (32, 64, 2), (64, 64, 1)]
# (cin, cout) for the 3 ConvTranspose3d up layers
_UP_SPECS = [(64, 32), (32, 16), (16, 8)]


def init_params(key):
    """Deterministic synthetic parameters matching CostRegNet(num_channels=1)."""
    # TODO(synk): BatchNorm is folded in eval mode with synthetic running stats;
    # training-mode batch statistics are not implemented.
    params = {"down": [], "up": []}

    def bn_affine(k, c):
        k1, k2, k3, k4 = jax.random.split(k, 4)
        gamma = 1.0 + 0.1 * jax.random.normal(k1, (c,), jnp.float32)
        beta = 0.1 * jax.random.normal(k2, (c,), jnp.float32)
        running_mean = 0.1 * jax.random.normal(k3, (c,), jnp.float32)
        running_var = 0.5 + jax.random.uniform(k4, (c,), jnp.float32)
        scale = gamma / jnp.sqrt(running_var + _BN_EPS)
        bias = beta - running_mean * scale
        return scale, bias

    for cin, cout, stride in _DOWN_SPECS:
        key, kw, kb = jax.random.split(key, 3)
        w = jax.random.normal(kw, (3, 3, 3, cin, cout), jnp.float32) * (27.0 * cin) ** -0.5
        scale, bias = bn_affine(kb, cout)
        params["down"].append(dict(w=w, scale=scale, bias=bias, stride=stride))
    for cin, cout in _UP_SPECS:
        key, kw, kb = jax.random.split(key, 3)
        w_t = jax.random.normal(kw, (cin, cout, 3, 3, 3), jnp.float32) * (27.0 * cin) ** -0.5
        scale, bias = bn_affine(kb, cout)
        params["up"].append(dict(w_t=w_t, scale=scale, bias=bias))
    key, kw, kb = jax.random.split(key, 3)
    params["prob_w"] = jax.random.normal(kw, (3, 3, 3, 8, 1), jnp.float32) * (27.0 * 8.0) ** -0.5
    params["prob_b"] = 0.01 * jax.random.normal(kb, (1,), jnp.float32)
    return params


def volume_conv_net(params, volume_variance, depth_values):
    """VolumeConvNet.forward.

    volume_variance: (B, 1, D, H, W)  (PyTorch NCDHW)
    depth_values:    (B, D)
    returns depth:   (B, H, W)
    """
    num_layers = 3
    # NCDHW -> NDHWC (channels on the lane axis), bf16 activations throughout.
    x = jnp.transpose(volume_variance, (0, 2, 3, 4, 1)).astype(jnp.bfloat16)

    def run_down(hact, layer):
        return conv3d_bn_relu(hact, layer["w"], layer["scale"], layer["bias"],
                              stride=layer["stride"], relu=True)

    down = params["down"]
    conv_outputs = [run_down(x, down[0])]
    for num in range(num_layers):
        h = run_down(conv_outputs[-1], down[num * 2 + 1])
        h = run_down(h, down[num * 2 + 2])
        conv_outputs.append(h)

    out = conv_outputs[-1]
    for i, layer in enumerate(params["up"]):
        skip = conv_outputs[-2 - i]
        out = skip + conv_transpose3d_bn_relu(out, layer["w_t"], layer["scale"],
                                              layer["bias"])

    # self.prob: Conv3d(8, 1, 3, stride=1, padding=1) with bias, no BN, no ReLU
    ones = jnp.ones((1,), jnp.float32)
    out = conv3d_bn_relu(out, params["prob_w"], ones, params["prob_b"],
                         stride=1, relu=False, out_dtype=jnp.float32)  # (B,D,H,W,1)
    cost_reg = out[..., 0]                                # == squeeze(1) in NCDHW
    # softmax over depth planes + depth regression (Pallas kernel)
    return softmax_depth_regression(cost_reg, depth_values)


if __name__ == "__main__":
    key = jax.random.PRNGKey(0)
    kp, kx, kd = jax.random.split(key, 3)
    params = init_params(kp)

    B, C, D, H, W = 2, 1, 16, 16, 16
    volume_variance = jax.random.normal(kx, (B, C, D, H, W), jnp.float32)
    base = jnp.linspace(1.0, 2.0, D, dtype=jnp.float32)
    offsets = 0.1 * jax.random.uniform(kd, (B, 1), jnp.float32)
    depth_values = base[None, :] + offsets                 # (B, D)

    depth = volume_conv_net(params, volume_variance, depth_values)
    depth = jax.block_until_ready(depth)
    assert depth.shape == (B, H, W), depth.shape
    assert bool(jnp.all(jnp.isfinite(depth)))
    print("KERNEL_OK")
</pallas_src>

<mosaic_0001>
module attributes {stable_mosaic.version = 11 : i64} {
  func.func @_matmul_affine_kernel(%arg0: i32, %arg1: memref<1024x27xbf16, #tpu.memory_space<vmem>>, %arg2: memref<27x8xbf16, #tpu.memory_space<vmem>>, %arg3: memref<1x8xf32, #tpu.memory_space<vmem>>, %arg4: memref<1x8xf32, #tpu.memory_space<vmem>>, %arg5: memref<1024x8xbf16, #tpu.memory_space<vmem>>) attributes {dimension_semantics = [#tpu.dimension_semantics<parallel>], iteration_bounds = array<i64: 8>, scalar_prefetch = 0 : i64, scratch_operands = 0 : i64, tpu.core_type = #tpu.core_type<tc>, window_params = [{transform_indices = @transform_0, window_bounds = array<i64: 1024, 27>}, {pipeline_mode = #tpu.pipeline_mode<synchronous>, transform_indices = @transform_1, window_bounds = array<i64: 27, 8>}, {pipeline_mode = #tpu.pipeline_mode<synchronous>, transform_indices = @transform_2, window_bounds = array<i64: 1, 8>}, {pipeline_mode = #tpu.pipeline_mode<synchronous>, transform_indices = @transform_3, window_bounds = array<i64: 1, 8>}, {transform_indices = @transform_4, window_bounds = array<i64: 1024, 8>}]} {
    %c0 = arith.constant 0 : index
    %c0_0 = arith.constant 0 : index
    %0 = vector.load %arg1[%c0, %c0_0] : memref<1024x27xbf16, #tpu.memory_space<vmem>>, vector<1024x27xbf16>
    %c0_1 = arith.constant 0 : index
    %c0_2 = arith.constant 0 : index
    %1 = vector.load %arg2[%c0_1, %c0_2] : memref<27x8xbf16, #tpu.memory_space<vmem>>, vector<27x8xbf16>
    %cst = arith.constant dense<0.000000e+00> : vector<1024x8xf32>
    %2 = tpu.matmul %0, %1, %cst {dimension_numbers = #tpu.dot_dimension_numbers<[1], [0], [0], [1], [0, 0, 1, 1], [], []>} : vector<1024x27xbf16>, vector<27x8xbf16>, vector<1024x8xf32> -> vector<1024x8xf32>
    %c0_3 = arith.constant 0 : index
    %c0_4 = arith.constant 0 : index
    %3 = vector.load %arg3[%c0_3, %c0_4] : memref<1x8xf32, #tpu.memory_space<vmem>>, vector<1x8xf32>
    %4 = vector.broadcast %3 : vector<1x8xf32> to vector<1024x8xf32>
    %5 = arith.mulf %2, %4 : vector<1024x8xf32>
    %c0_5 = arith.constant 0 : index
    %c0_6 = arith.constant 0 : index
    %6 = vector.load %arg4[%c0_5, %c0_6] : memref<1x8xf32, #tpu.memory_space<vmem>>, vector<1x8xf32>
    %7 = vector.broadcast %6 : vector<1x8xf32> to vector<1024x8xf32>
    %8 = arith.addf %5, %7 : vector<1024x8xf32>
    %cst_7 = arith.constant 0.000000e+00 : f32
    %9 = vector.broadcast %cst_7 : f32 to vector<1024x8xf32>
    %10 = arith.maximumf %8, %9 : vector<1024x8xf32>
    %11 = arith.truncf %10 : vector<1024x8xf32> to vector<1024x8xbf16>
    %c0_8 = arith.constant 0 : index
    %c0_9 = arith.constant 0 : index
    %12 = vector.load %arg5[%c0_8, %c0_9] : memref<1024x8xbf16, #tpu.memory_space<vmem>>, vector<1024x8xbf16>
    tpu.vector_store %arg5[%c0_8, %c0_9], %11 {strides = array<i32>} : memref<1024x8xbf16, #tpu.memory_space<vmem>>, vector<1024x8xbf16>,
    return
  }
  func.func @transform_0(%arg0: i32) -> (i32, i32) {
    %c0_i32 = arith.constant 0 : i32
    %c0_i32_0 = arith.constant 0 : i32
    return %arg0, %c0_i32 : i32, i32
  }
  func.func @transform_1(%arg0: i32) -> (i32, i32) {
    %c0_i32 = arith.constant 0 : i32
    %c0_i32_0 = arith.constant 0 : i32
    %c0_i32_1 = arith.constant 0 : i32
    return %c0_i32, %c0_i32_0 : i32, i32
  }
  func.func @transform_2(%arg0: i32) -> (i32, i32) {
    %c0_i32 = arith.constant 0 : i32
    %c0_i32_0 = arith.constant 0 : i32
    %c0_i32_1 = arith.constant 0 : i32
    return %c0_i32, %c0_i32_0 : i32, i32
  }
  func.func @transform_3(%arg0: i32) -> (i32, i32) {
    %c0_i32 = arith.constant 0 : i32
    %c0_i32_0 = arith.constant 0 : i32
    %c0_i32_1 = arith.constant 0 : i32
    return %c0_i32, %c0_i32_0 : i32, i32
  }
  func.func @transform_4(%arg0: i32) -> (i32, i32) {
    %c0_i32 = arith.constant 0 : i32
    %c0_i32_0 = arith.constant 0 : i32
    return %arg0, %c0_i32 : i32, i32
  }
}

</mosaic_0001>

<llo_original>
// kernel: tpu_custom_call.1
$region0: #{tpu_custom_call.1}
  #allocation0 [shape = 'u32[]', space=smem, size = 0x4, offset = 0x4, fixed_abs, tag = 'smem constant byte address 0x4 - core index']
  #allocation1 [shape = 'u32[72,128]{1,0:T(1,128)}', space=vmem, size = 0x9000, scoped, tag = 'internal scratch']
  %s0 = inlined_call_operand.vmem [shape: bf16[8192,27], index: 0, kind: input, shape index: {}]
  %s1 = inlined_call_operand.vmem [shape: bf16[27,8], index: 1, kind: input, shape index: {}]
  %s2 = inlined_call_operand.vmem [shape: f32[1,8], index: 2, kind: input, shape index: {}]
  %s3 = inlined_call_operand.vmem [shape: f32[1,8], index: 3, kind: input, shape index: {}]
  %s4 = inlined_call_operand.vmem [shape: bf16[8192,8], index: 4, kind: output, shape index: {}]
  %s5 = sld [smem:[#allocation0]]
  $region49: #{tpu_custom_call.1} parent=0
    _
  %s7 = ssub.s32 1, %s5
  %s8 = scalar_select 0, %s7, %s5
  loop: start=0, step=1, limit=10
  $region2: #{tpu_custom_call.1} parent=0 // loop_pre_header
    _
  $region3: #{tpu_custom_call.1} parent=0 // loop_header
    %s10 = sphi 0, %s14
    %p11 = scmp.ge.s32.totalorder %s10, 10
    %s20 = sphi 0, %s22
    %s23 = sphi 0, %s20
    %s24 = sphi 0, %s23
    %s40 = sphi 0, %s24
    %s44 = sphi 0, %s44
    %s46 = sphi 0, %s44
    %s47 = sphi 0, %s46
    %s61 = sphi 0, %s47
    %s65 = sphi 0, %s65
    %s67 = sphi 0, %s65
    %s68 = sphi 0, %s67
    %s82 = sphi 0, %s68
    %s86 = sphi 0, %s86
    %s88 = sphi 0, %s86
    %s89 = sphi 0, %s88
    %s103 = sphi 0, %s89
    %s109 = sphi 0, %s111
    %s112 = sphi 0, %s109
    %s113 = sphi 0, %s112
    %s129 = sphi 0, %s113
  $region4: #{tpu_custom_call.1} parent=0 // loop_header_branch
    %13 = sbr.rel (%p11) target = $region8
  $region5: #{tpu_custom_call.1} parent=0 // loop_body
    %s15 = ssub.s32 %s10, 1
    %s16 = ssub.s32 %s10, 2
    %s17 = sadd.s32 %s10, 1
    %s18 = ssub.s32 %s10, %s17
    %p19 = scmp.eq.s32.totalorder %s18, 0
    %s21 = sadd.s32 %s20, 1
    %s22 = scalar_select %p19, %s20, %s21
    %p25 = pneg %p19
    %p26 = scmp.eq.s32.totalorder %s10, 7
    %p27 = por %p25, %p26
    %p28 = scmp.ne.s32.totalorder %s20, %s23
    %p29 = scmp.eq.s32.totalorder %s10, 0
    %p30 = por %p28, %p29
    %p31 = scmp.ne.s32.totalorder %s20, %s23
    %p32 = scmp.eq.s32.totalorder %s15, 7
    %p33 = por %p31, %p32
    %p34 = scmp.ne.s32.totalorder %s23, %s24
    %p35 = scmp.eq.s32.totalorder %s15, 0
    %p36 = por %p34, %p35
    %p37 = scmp.ne.s32.totalorder %s23, %s24
    %p38 = scmp.eq.s32.totalorder %s16, 7
    %p39 = por %p37, %p38
    %p41 = scmp.ne.s32.totalorder %s24, %s40
    %p42 = scmp.eq.s32.totalorder %s16, 0
    %p43 = por %p41, %p42
    %s45 = sadd.s32 %s44, 1
    %p48 = scmp.eq.s32.totalorder %s10, 7
    %p49 = scmp.ne.s32.totalorder %s44, %s46
    %p50 = scmp.eq.s32.totalorder %s10, 0
    %p51 = por %p49, %p50
    %p52 = scmp.ne.s32.totalorder %s44, %s46
    %p53 = scmp.eq.s32.totalorder %s15, 7
    %p54 = por %p52, %p53
    %p55 = scmp.ne.s32.totalorder %s46, %s47
    %p56 = scmp.eq.s32.totalorder %s15, 0
    %p57 = por %p55, %p56
    %p58 = scmp.ne.s32.totalorder %s46, %s47
    %p59 = scmp.eq.s32.totalorder %s16, 7
    %p60 = por %p58, %p59
    %p62 = scmp.ne.s32.totalorder %s47, %s61
    %p63 = scmp.eq.s32.totalorder %s16, 0
    %p64 = por %p62, %p63
    %s66 = sadd.s32 %s65, 1
    %p69 = scmp.eq.s32.totalorder %s10, 7
    %p70 = scmp.ne.s32.totalorder %s65, %s67
    %p71 = scmp.eq.s32.totalorder %s10, 0
    %p72 = por %p70, %p71
    %p73 = scmp.ne.s32.totalorder %s65, %s67
    %p74 = scmp.eq.s32.totalorder %s15, 7
    %p75 = por %p73, %p74
    %p76 = scmp.ne.s32.totalorder %s67, %s68
    %p77 = scmp.eq.s32.totalorder %s15, 0
    %p78 = por %p76, %p77
    %p79 = scmp.ne.s32.totalorder %s67, %s68
    %p80 = scmp.eq.s32.totalorder %s16, 7
    %p81 = por %p79, %p80
    %p83 = scmp.ne.s32.totalorder %s68, %s82
    %p84 = scmp.eq.s32.totalorder %s16, 0
    %p85 = por %p83, %p84
    %s87 = sadd.s32 %s86, 1
    %p90 = scmp.eq.s32.totalorder %s10, 7
    %p91 = scmp.ne.s32.totalorder %s86, %s88
    %p92 = scmp.eq.s32.totalorder %s10, 0
    %p93 = por %p91, %p92
    %p94 = scmp.ne.s32.totalorder %s86, %s88
    %p95 = scmp.eq.s32.totalorder %s15, 7
    %p96 = por %p94, %p95
    %p97 = scmp.ne.s32.totalorder %s88, %s89
    %p98 = scmp.eq.s32.totalorder %s15, 0
    %p99 = por %p97, %p98
    %p100 = scmp.ne.s32.totalorder %s88, %s89
    %p101 = scmp.eq.s32.totalorder %s16, 7
    %p102 = por %p100, %p101
    %p104 = scmp.ne.s32.totalorder %s89, %s103
    %p105 = scmp.eq.s32.totalorder %s16, 0
    %p106 = por %p104, %p105
    %s107 = ssub.s32 %s10, %s17
    %p108 = scmp.eq.s32.totalorder %s107, 0
    %s110 = sadd.s32 %s109, 1
    %s111 = scalar_select %p108, %s109, %s110
    %p114 = pneg %p108
    %p115 = scmp.eq.s32.totalorder %s10, 7
    %p116 = por %p114, %p115
    %p117 = scmp.ne.s32.totalorder %s109, %s112
    %p118 = scmp.eq.s32.totalorder %s10, 0
    %p119 = por %p117, %p118
    %p120 = scmp.ne.s32.totalorder %s109, %s112
    %p121 = scmp.eq.s32.totalorder %s15, 7
    %p122 = por %p120, %p121
    %p123 = scmp.ne.s32.totalorder %s112, %s113
    %p124 = scmp.eq.s32.totalorder %s15, 0
    %p125 = por %p123, %p124
    %p126 = scmp.ne.s32.totalorder %s112, %s113
    %p127 = scmp.eq.s32.totalorder %s16, 7
    %p128 = por %p126, %p127
    %p130 = scmp.ne.s32.totalorder %s113, %s129
    %p131 = scmp.eq.s32.totalorder %s16, 0
    %p132 = por %p130, %p131
    %p133 = scmp.le.s32.totalorder 1, %s10
    %p134 = scmp.lt.s32.totalorder %s10, 9
    %p135 = pnand %p133, %p134
    %p136 = pneg %p135
    // Predicated region
    $region9: #{tpu_custom_call.1} parent=5 // pred_check
      _
    $region10: #{tpu_custom_call.1} parent=5 // pred_check_branch
      %138 = sbr.rel (%p135) target = $region12
    $region11: #{tpu_custom_call.1} parent=5 // pred_region
      %s139 = ssub.s32 %s10, 1
      // Predicated region
      $region13: #{tpu_custom_call.1} parent=11 // pred_check
        %p140 = pneg %p57
      $region14: #{tpu_custom_call.1} parent=11 // pred_check_branch
        %142 = sbr.rel (%p140) target = $region16
      $region15: #{tpu_custom_call.1} parent=11 // pred_region
        _
      $region16: #{tpu_custom_call.1} parent=11 // pred_fallthru
        _
      // Predicated region
      $region17: #{tpu_custom_call.1} parent=11 // pred_check
        %p143 = pneg %p78
      $region18: #{tpu_custom_call.1} parent=11 // pred_check_branch
        %145 = sbr.rel (%p143) target = $region20
      $region19: #{tpu_custom_call.1} parent=11 // pred_region
        _
      $region20: #{tpu_custom_call.1} parent=11 // pred_fallthru
        _
      // Predicated region
      $region21: #{tpu_custom_call.1} parent=11 // pred_check
        %p146 = pneg %p99
      $region22: #{tpu_custom_call.1} parent=11 // pred_check_branch
        %148 = sbr.rel (%p146) target = $region24
      $region23: #{tpu_custom_call.1} parent=11 // pred_region
        _
      $region24: #{tpu_custom_call.1} parent=11 // pred_fallthru
        _
    $region12: #{tpu_custom_call.1} parent=5 // pred_fallthru
      _
    %p149 = scmp.lt.s32.totalorder %s10, 8
    // Predicated region
    $region25: #{tpu_custom_call.1} parent=5 // pred_check
      %p150 = pneg %p149
    $region26: #{tpu_custom_call.1} parent=5 // pred_check_branch
      %152 = sbr.rel (%p150) target = $region28
    $region27: #{tpu_custom_call.1} parent=5 // pred_region
      // Predicated region
      $region29: #{tpu_custom_call.1} parent=27 // pred_check
        %p153 = pneg %p30
      $region30: #{tpu_custom_call.1} parent=27 // pred_check_branch
        %155 = sbr.rel (%p153) target = $region32
      $region31: #{tpu_custom_call.1} parent=27 // pred_region
        %s156 = smul.u32 128, %s10
        %p157 = scmp.lt.s32.totalorder %s156, 1023
        %s158 = scalar_select %p157, %s156, 1023
        %s159 = smul.addr %s158, 4
        %s160 = scalar_lea.vmem %s0, %s159
        %s161 = smul.u32 128, %s10
      $region32: #{tpu_custom_call.1} parent=27 // pred_fallthru
        _
    $region28: #{tpu_custom_call.1} parent=5 // pred_fallthru
      _
    %p162 = scmp.le.s32.totalorder 1, %s10
    %p163 = scmp.lt.s32.totalorder %s10, 9
    %p164 = pnand %p162, %p163
    %p165 = pneg %p164
    // Predicated region
    $region33: #{tpu_custom_call.1} parent=5 // pred_check
      _
    $region34: #{tpu_custom_call.1} parent=5 // pred_check_branch
      %167 = sbr.rel (%p164) target = $region36
    $region35: #{tpu_custom_call.1} parent=5 // pred_region
      %s168 = ssub.s32 %s10, 1
      %s169 = smul.u32 128, %s15
      %p170 = scmp.lt.s32.totalorder %s169, 1023
      %s171 = scalar_select %p170, %s169, 1023
      %s172 = smul.addr %s171, 4
      %s173 = scalar_lea.vmem %s0, %s172
      %p174 = pneg %p36
      %p175 = pneg %p33
      %p176 = pneg %p57
      %p177 = pneg %p54
      %p178 = pneg %p78
      %p179 = pneg %p75
      %p180 = pneg %p99
      %p181 = pneg %p96
      %p182 = pneg %p125
      %p183 = pneg %p122
      %s184 = smul.u32 128, %s15
      %p185 = scmp.lt.s32.totalorder %s184, 1023
      %s186 = scalar_select %p185, %s184, 1023
      %s187 = smul.addr %s186, 4
      %s188 = scalar_lea.vmem %s4, %s187
      %s189 = smul.u32 128, %s15
      %p190 = scmp.lt.s32.totalorder %s189, 1023
      %s191 = scalar_select %p190, %s189, 1023
      %s192 = smul.addr %s191, 4
      %s193 = scalar_lea.vmem %s0, %s192
      %s194 = smul.u32 128, %s15
      %s195 = smul.u32 128, %s15
      %p196 = scmp.lt.s32.totalorder %s195, 1023
      %s197 = scalar_select %p196, %s195, 1023
      %s198 = smul.addr %s197, 4
      %s199 = scalar_lea.vmem %s4, %s198
      %s200 = smul.u32 128, %s15
      %v202 = vld [vmem:[%s193] sm:$0xf]
      %v203 = vld [vmem:[%s193 + $0x4] sm:$0xf]
      %v204 = vld [vmem:[%s193 + $0x8] sm:$0xf]
      %v205 = vld [vmem:[%s193 + $0xc] sm:$0xf]
      %v206 = vld [vmem:[%s193 + $0x10] sm:$0xf]
      %v207 = vld [vmem:[%s193 + $0x14] sm:$0xf]
      %v208 = vld [vmem:[%s193 + $0x18] sm:$0xf]
      %v209 = vld [vmem:[%s193 + $0x1c] sm:$0xf]
      %v210 = vld [vmem:[%s193 + $0x20] sm:$0xf]
      %v211 = vld [vmem:[%s193 + $0x24] sm:$0xf]
      %v212 = vld [vmem:[%s193 + $0x28] sm:$0xf]
      %v213 = vld [vmem:[%s193 + $0x2c] sm:$0xf]
      %v214 = vld [vmem:[%s193 + $0x30] sm:$0xf]
      %v215 = vld [vmem:[%s193 + $0x34] sm:$0xf]
      %v216 = vld [vmem:[%s193 + $0x38] sm:$0xf]
      %v217 = vld [vmem:[%s193 + $0x3c] sm:$0xf]
      %v218 = vld [vmem:[%s193 + $0x40] sm:$0xf]
      %v219 = vld [vmem:[%s193 + $0x44] sm:$0xf]
      %v220 = vld [vmem:[%s193 + $0x48] sm:$0xf]
      %v221 = vld [vmem:[%s193 + $0x4c] sm:$0xf]
      %v222 = vld [vmem:[%s193 + $0x50] sm:$0xf]
      %v223 = vld [vmem:[%s193 + $0x54] sm:$0xf]
      %v224 = vld [vmem:[%s193 + $0x58] sm:$0xf]
      %v225 = vld [vmem:[%s193 + $0x5c] sm:$0xf]
      %v226 = vld [vmem:[%s193 + $0x60] sm:$0xf]
      %v227 = vld [vmem:[%s193 + $0x64] sm:$0xf]
      %v228 = vld [vmem:[%s193 + $0x68] sm:$0xf]
      %v229 = vld [vmem:[%s193 + $0x6c] sm:$0xf]
      %v230 = vld [vmem:[%s193 + $0x70] sm:$0xf]
      %v231 = vld [vmem:[%s193 + $0x74] sm:$0xf]
      %v232 = vld [vmem:[%s193 + $0x78] sm:$0xf]
      %v233 = vld [vmem:[%s193 + $0x7c] sm:$0xf]
      %v234 = vld [vmem:[%s193 + $0x80] sm:$0xf]
      %v235 = vld [vmem:[%s193 + $0x84] sm:$0xf]
      %v236 = vld [vmem:[%s193 + $0x88] sm:$0xf]
      %v237 = vld [vmem:[%s193 + $0x8c] sm:$0xf]
      %v238 = vld [vmem:[%s193 + $0x90] sm:$0xf]
      %v239 = vld [vmem:[%s193 + $0x94] sm:$0xf]
      %v240 = vld [vmem:[%s193 + $0x98] sm:$0xf]
      %v241 = vld [vmem:[%s193 + $0x9c] sm:$0xf]
      %v242 = vld [vmem:[%s193 + $0xa0] sm:$0xf]
      %v243 = vld [vmem:[%s193 + $0xa4] sm:$0xf]
      %v244 = vld [vmem:[%s193 + $0xa8] sm:$0xf]
      %v245 = vld [vmem:[%s193 + $0xac] sm:$0xf]
      %v246 = vld [vmem:[%s193 + $0xb0] sm:$0xf]
      %v247 = vld [vmem:[%s193 + $0xb4] sm:$0xf]
      %v248 = vld [vmem:[%s193 + $0xb8] sm:$0xf]
      %v249 = vld [vmem:[%s193 + $0xbc] sm:$0xf]
      %v250 = vld [vmem:[%s193 + $0xc0] sm:$0xf]
      %v251 = vld [vmem:[%s193 + $0xc4] sm:$0xf]
      %v252 = vld [vmem:[%s193 + $0xc8] sm:$0xf]
      %v253 = vld [vmem:[%s193 + $0xcc] sm:$0xf]
      %v254 = vld [vmem:[%s193 + $0xd0] sm:$0xf]
      %v255 = vld [vmem:[%s193 + $0xd4] sm:$0xf]
      %v256 = vld [vmem:[%s193 + $0xd8] sm:$0xf]
      %v257 = vld [vmem:[%s193 + $0xdc] sm:$0xf]
      %v258 = vld [vmem:[%s193 + $0xe0] sm:$0xf]
      %v259 = vld [vmem:[%s193 + $0xe4] sm:$0xf]
      %v260 = vld [vmem:[%s193 + $0xe8] sm:$0xf]
      %v261 = vld [vmem:[%s193 + $0xec] sm:$0xf]
      %v262 = vld [vmem:[%s193 + $0xf0] sm:$0xf]
      %v263 = vld [vmem:[%s193 + $0xf4] sm:$0xf]
      %v264 = vld [vmem:[%s193 + $0xf8] sm:$0xf]
      %v265 = vld [vmem:[%s193 + $0xfc] sm:$0xf]
      %v266 = vld [vmem:[%s193 + $0x100] sm:$0xf]
      %v267 = vld [vmem:[%s193 + $0x104] sm:$0xf]
      %v268 = vld [vmem:[%s193 + $0x108] sm:$0xf]
      %v269 = vld [vmem:[%s193 + $0x10c] sm:$0xf]
      %v270 = vld [vmem:[%s193 + $0x110] sm:$0xf]
      %v271 = vld [vmem:[%s193 + $0x114] sm:$0xf]
      %v272 = vld [vmem:[%s193 + $0x118] sm:$0xf]
      %v273 = vld [vmem:[%s193 + $0x11c] sm:$0xf]
      %v274 = vld [vmem:[%s193 + $0x120] sm:$0xf]
      %v275 = vld [vmem:[%s193 + $0x124] sm:$0xf]
      %v276 = vld [vmem:[%s193 + $0x128] sm:$0xf]
      %v277 = vld [vmem:[%s193 + $0x12c] sm:$0xf]
      %v278 = vld [vmem:[%s193 + $0x130] sm:$0xf]
      %v279 = vld [vmem:[%s193 + $0x134] sm:$0xf]
      %v280 = vld [vmem:[%s193 + $0x138] sm:$0xf]
      %v281 = vld [vmem:[%s193 + $0x13c] sm:$0xf]
      %v282 = vld [vmem:[%s193 + $0x140] sm:$0xf]
      %v283 = vld [vmem:[%s193 + $0x144] sm:$0xf]
      %v284 = vld [vmem:[%s193 + $0x148] sm:$0xf]
      %v285 = vld [vmem:[%s193 + $0x14c] sm:$0xf]
      %v286 = vld [vmem:[%s193 + $0x150] sm:$0xf]
      %v287 = vld [vmem:[%s193 + $0x154] sm:$0xf]
      %v288 = vld [vmem:[%s193 + $0x158] sm:$0xf]
      %v289 = vld [vmem:[%s193 + $0x15c] sm:$0xf]
      %v290 = vld [vmem:[%s193 + $0x160] sm:$0xf]
      %v291 = vld [vmem:[%s193 + $0x164] sm:$0xf]
      %v292 = vld [vmem:[%s193 + $0x168] sm:$0xf]
      %v293 = vld [vmem:[%s193 + $0x16c] sm:$0xf]
      %v294 = vld [vmem:[%s193 + $0x170] sm:$0xf]
      %v295 = vld [vmem:[%s193 + $0x174] sm:$0xf]
      %v296 = vld [vmem:[%s193 + $0x178] sm:$0xf]
      %v297 = vld [vmem:[%s193 + $0x17c] sm:$0xf]
      %v298 = vld [vmem:[%s193 + $0x180] sm:$0xf]
      %v299 = vld [vmem:[%s193 + $0x184] sm:$0xf]
      %v300 = vld [vmem:[%s193 + $0x188] sm:$0xf]
      %v301 = vld [vmem:[%s193 + $0x18c] sm:$0xf]
      %v302 = vld [vmem:[%s193 + $0x190] sm:$0xf]
      %v303 = vld [vmem:[%s193 + $0x194] sm:$0xf]
      %v304 = vld [vmem:[%s193 + $0x198] sm:$0xf]
      %v305 = vld [vmem:[%s193 + $0x19c] sm:$0xf]
      %v306 = vld [vmem:[%s193 + $0x1a0] sm:$0xf]
      %v307 = vld [vmem:[%s193 + $0x1a4] sm:$0xf]
      %v308 = vld [vmem:[%s193 + $0x1a8] sm:$0xf]
      %v309 = vld [vmem:[%s193 + $0x1ac] sm:$0xf]
      %v310 = vld [vmem:[%s193 + $0x1b0] sm:$0xf]
      %v311 = vld [vmem:[%s193 + $0x1b4] sm:$0xf]
      %v312 = vld [vmem:[%s193 + $0x1b8] sm:$0xf]
      %v313 = vld [vmem:[%s193 + $0x1bc] sm:$0xf]
      %v314 = vld [vmem:[%s193 + $0x1c0] sm:$0xf]
      %v315 = vld [vmem:[%s193 + $0x1c4] sm:$0xf]
      %v316 = vld [vmem:[%s193 + $0x1c8] sm:$0xf]
      %v317 = vld [vmem:[%s193 + $0x1cc] sm:$0xf]
      %v318 = vld [vmem:[%s193 + $0x1d0] sm:$0xf]
      %v319 = vld [vmem:[%s193 + $0x1d4] sm:$0xf]
      %v320 = vld [vmem:[%s193 + $0x1d8] sm:$0xf]
      %v321 = vld [vmem:[%s193 + $0x1dc] sm:$0xf]
      %v322 = vld [vmem:[%s193 + $0x1e0] sm:$0xf]
      %v323 = vld [vmem:[%s193 + $0x1e4] sm:$0xf]
      %v324 = vld [vmem:[%s193 + $0x1e8] sm:$0xf]
      %v325 = vld [vmem:[%s193 + $0x1ec] sm:$0xf]
      %v326 = vld [vmem:[%s193 + $0x1f0] sm:$0xf]
      %v327 = vld [vmem:[%s193 + $0x1f4] sm:$0xf]
      %v328 = vld [vmem:[%s193 + $0x1f8] sm:$0xf]
      %v329 = vld [vmem:[%s193 + $0x1fc] sm:$0xf]
      %v330 = vld [vmem:[%s1] sm:$0xf]
      %v331 = vld [vmem:[%s1 + $0x4] sm:$0xf]
      %v332 = vld [vmem:[%s1 + $0x8] sm:$0xf]
      %v333 = vld [vmem:[%s1 + $0xc] sm:$0x3]
      %v462 = vunpack.c.l.b16 %v202
      %v463 = vunpack.c.l.b16 %v203
      %v464 = vunpack.c.l.b16 %v204
      %v465 = vunpack.c.l.b16 %v205
      %v466 = vunpack.c.l.b16 %v206
      %v467 = vunpack.c.l.b16 %v207
      %v468 = vunpack.c.l.b16 %v208
      %v469 = vunpack.c.l.b16 %v209
      %v470 = vunpack.c.l.b16 %v210
      %v471 = vunpack.c.l.b16 %v211
      %v472 = vunpack.c.l.b16 %v212
      %v473 = vunpack.c.l.b16 %v213
      %v474 = vunpack.c.l.b16 %v214
      %v475 = vunpack.c.l.b16 %v215
      %v476 = vunpack.c.l.b16 %v216
      %v477 = vunpack.c.l.b16 %v217
      %v478 = vunpack.c.l.b16 %v218
      %v479 = vunpack.c.l.b16 %v219
      %v480 = vunpack.c.l.b16 %v220
      %v481 = vunpack.c.l.b16 %v221
      %v482 = vunpack.c.l.b16 %v222
      %v483 = vunpack.c.l.b16 %v223
      %v484 = vunpack.c.l.b16 %v224
      %v485 = vunpack.c.l.b16 %v225
      %v486 = vunpack.c.l.b16 %v226
      %v487 = vunpack.c.l.b16 %v227
      %v488 = vunpack.c.l.b16 %v228
      %v489 = vunpack.c.l.b16 %v229
      %v490 = vunpack.c.l.b16 %v230
      %v491 = vunpack.c.l.b16 %v231
      %v492 = vunpack.c.l.b16 %v232
      %v493 = vunpack.c.l.b16 %v233
      %v494 = vunpack.c.l.b16 %v234
      %v495 = vunpack.c.l.b16 %v235
      %v496 = vunpack.c.l.b16 %v236
      %v497 = vunpack.c.l.b16 %v237
      %v498 = vunpack.c.l.b16 %v238
      %v499 = vunpack.c.l.b16 %v239
      %v500 = vunpack.c.l.b16 %v240
      %v501 = vunpack.c.l.b16 %v241
      %v502 = vunpack.c.l.b16 %v242
      %v503 = vunpack.c.l.b16 %v243
      %v504 = vunpack.c.l.b16 %v244
      %v505 = vunpack.c.l.b16 %v245
      %v506 = vunpack.c.l.b16 %v246
      %v507 = vunpack.c.l.b16 %v247
      %v508 = vunpack.c.l.b16 %v248
      %v509 = vunpack.c.l.b16 %v249
      %v510 = vunpack.c.l.b16 %v250
      %v511 = vunpack.c.l.b16 %v251
      %v512 = vunpack.c.l.b16 %v252
      %v513 = vunpack.c.l.b16 %v253
      %v514 = vunpack.c.l.b16 %v254
      %v515 = vunpack.c.l.b16 %v255
      %v516 = vunpack.c.l.b16 %v256
      %v517 = vunpack.c.l.b16 %v257
      %v518 = vunpack.c.l.b16 %v258
      %v519 = vunpack.c.l.b16 %v259
      %v520 = vunpack.c.l.b16 %v260
      %v521 = vunpack.c.l.b16 %v261
      %v522 = vunpack.c.l.b16 %v262
      %v523 = vunpack.c.l.b16 %v263
      %v524 = vunpack.c.l.b16 %v264
      %v525 = vunpack.c.l.b16 %v265
      %v526 = vunpack.c.l.b16 %v266
      %v527 = vunpack.c.l.b16 %v267
      %v528 = vunpack.c.l.b16 %v268
      %v529 = vunpack.c.l.b16 %v269
      %v530 = vunpack.c.l.b16 %v270
      %v531 = vunpack.c.l.b16 %v271
      %v532 = vunpack.c.l.b16 %v272
      %v533 = vunpack.c.l.b16 %v273
      %v534 = vunpack.c.l.b16 %v274
      %v535 = vunpack.c.l.b16 %v275
      %v536 = vunpack.c.l.b16 %v276
      %v537 = vunpack.c.l.b16 %v277
      %v538 = vunpack.c.l.b16 %v278
      %v539 = vunpack.c.l.b16 %v279
      %v540 = vunpack.c.l.b16 %v280
      %v541 = vunpack.c.l.b16 %v281
      %v542 = vunpack.c.l.b16 %v282
      %v543 = vunpack.c.l.b16 %v283
      %v544 = vunpack.c.l.b16 %v284
      %v545 = vunpack.c.l.b16 %v285
      %v546 = vunpack.c.l.b16 %v286
      %v547 = vunpack.c.l.b16 %v287
      %v548 = vunpack.c.l.b16 %v288
      %v549 = vunpack.c.l.b16 %v289
      %v550 = vunpack.c.l.b16 %v290
      %v551 = vunpack.c.l.b16 %v291
      %v552 = vunpack.c.l.b16 %v292
      %v553 = vunpack.c.l.b16 %v293
      %v554 = vunpack.c.l.b16 %v294
      %v555 = vunpack.c.l.b16 %v295
      %v556 = vunpack.c.l.b16 %v296
      %v557 = vunpack.c.l.b16 %v297
      %v558 = vunpack.c.l.b16 %v298
      %v559 = vunpack.c.l.b16 %v299
      %v560 = vunpack.c.l.b16 %v300
      %v561 = vunpack.c.l.b16 %v301
      %v562 = vunpack.c.l.b16 %v302
      %v563 = vunpack.c.l.b16 %v303
      %v564 = vunpack.c.l.b16 %v304
      %v565 = vunpack.c.l.b16 %v305
      %v566 = vunpack.c.l.b16 %v306
      %v567 = vunpack.c.l.b16 %v307
      %v568 = vunpack.c.l.b16 %v308
      %v569 = vunpack.c.l.b16 %v309
      %v570 = vunpack.c.l.b16 %v310
      %v571 = vunpack.c.l.b16 %v311
      %v572 = vunpack.c.l.b16 %v312
      %v573 = vunpack.c.l.b16 %v313
      %v574 = vunpack.c.l.b16 %v314
      %v575 = vunpack.c.l.b16 %v315
      %v576 = vunpack.c.l.b16 %v316
      %v577 = vunpack.c.l.b16 %v317
      %v578 = vunpack.c.l.b16 %v318
      %v579 = vunpack.c.l.b16 %v319
      %v580 = vunpack.c.l.b16 %v320
      %v581 = vunpack.c.l.b16 %v321
      %v582 = vunpack.c.l.b16 %v322
      %v583 = vunpack.c.l.b16 %v323
      %v584 = vunpack.c.l.b16 %v324
      %v585 = vunpack.c.l.b16 %v325
      %v586 = vunpack.c.l.b16 %v326
      %v587 = vunpack.c.l.b16 %v327
      %v588 = vunpack.c.l.b16 %v328
      %v589 = vunpack.c.l.b16 %v329
      %v590 = vpack.c.b16 %v463, %v462
      %v591 = vpack.c.b16 %v465, %v464
      %v592 = vpack.c.b16 %v467, %v466
      %v593 = vpack.c.b16 %v469, %v468
      %v594 = vpack.c.b16 %v471, %v470
      %v595 = vpack.c.b16 %v473, %v472
      %v596 = vpack.c.b16 %v475, %v474
      %v597 = vpack.c.b16 %v477, %v476
      %v598 = vpack.c.b16 %v479, %v478
      %v599 = vpack.c.b16 %v481, %v480
      %v600 = vpack.c.b16 %v483, %v482
      %v601 = vpack.c.b16 %v485, %v484
      %v602 = vpack.c.b16 %v487, %v486
      %v603 = vpack.c.b16 %v489, %v488
      %v604 = vpack.c.b16 %v491, %v490
      %v605 = vpack.c.b16 %v493, %v492
      %v606 = vpack.c.b16 %v495, %v494
      %v607 = vpack.c.b16 %v497, %v496
      %v608 = vpack.c.b16 %v499, %v498
      %v609 = vpack.c.b16 %v501, %v500
      %v610 = vpack.c.b16 %v503, %v502
      %v611 = vpack.c.b16 %v505, %v504
      %v612 = vpack.c.b16 %v507, %v506
      %v613 = vpack.c.b16 %v509, %v508
      %v614 = vpack.c.b16 %v511, %v510
      %v615 = vpack.c.b16 %v513, %v512
      %v616 = vpack.c.b16 %v515, %v514
      %v617 = vpack.c.b16 %v517, %v516
      %v618 = vpack.c.b16 %v519, %v518
      %v619 = vpack.c.b16 %v521, %v520
      %v620 = vpack.c.b16 %v523, %v522
      %v621 = vpack.c.b16 %v525, %v524
      %v622 = vpack.c.b16 %v527, %v526
      %v623 = vpack.c.b16 %v529, %v528
      %v624 = vpack.c.b16 %v531, %v530
      %v625 = vpack.c.b16 %v533, %v532
      %v626 = vpack.c.b16 %v535, %v534
      %v627 = vpack.c.b16 %v537, %v536
      %v628 = vpack.c.b16 %v539, %v538
      %v629 = vpack.c.b16 %v541, %v540
      %v630 = vpack.c.b16 %v543, %v542
      %v631 = vpack.c.b16 %v545, %v544
      %v632 = vpack.c.b16 %v547, %v546
      %v633 = vpack.c.b16 %v549, %v548
      %v634 = vpack.c.b16 %v551, %v550
      %v635 = vpack.c.b16 %v553, %v552
      %v636 = vpack.c.b16 %v555, %v554
      %v637 = vpack.c.b16 %v557, %v556
      %v638 = vpack.c.b16 %v559, %v558
      %v639 = vpack.c.b16 %v561, %v560
      %v640 = vpack.c.b16 %v563, %v562
      %v641 = vpack.c.b16 %v565, %v564
      %v642 = vpack.c.b16 %v567, %v566
      %v643 = vpack.c.b16 %v569, %v568
      %v644 = vpack.c.b16 %v571, %v570
      %v645 = vpack.c.b16 %v573, %v572
      %v646 = vpack.c.b16 %v575, %v574
      %v647 = vpack.c.b16 %v577, %v576
      %v648 = vpack.c.b16 %v579, %v578
      %v649 = vpack.c.b16 %v581, %v580
      %v650 = vpack.c.b16 %v583, %v582
      %v651 = vpack.c.b16 %v585, %v584
      %v652 = vpack.c.b16 %v587, %v586
      %v653 = vpack.c.b16 %v589, %v588
      %v658 = vunpack.c.l.b16 %v330
      %v659 = vunpack.c.l.b16 %v331
      %v660 = vunpack.c.l.b16 %v332
      %v661 = vunpack.c.l.b16 %v333
      %v662 = vpack.c.b16 %v659, %v658
      %v663 = vpack.c.b16 %v661, %v660
      %vm665 = vcmask 220160
      %v667 = vsel %vm665, %v590, 0
      %v670 = vsel %vm665, %v591, 0
      %v673 = vsel %vm665, %v592, 0
      %v676 = vsel %vm665, %v593, 0
      %v679 = vsel %vm665, %v594, 0
      %v682 = vsel %vm665, %v595, 0
      %v685 = vsel %vm665, %v596, 0
      %v688 = vsel %vm665, %v597, 0
      %v691 = vsel %vm665, %v598, 0
      %v694 = vsel %vm665, %v599, 0
      %v697 = vsel %vm665, %v600, 0
      %v700 = vsel %vm665, %v601, 0
      %v703 = vsel %vm665, %v602, 0
      %v706 = vsel %vm665, %v603, 0
      %v709 = vsel %vm665, %v604, 0
      %v712 = vsel %vm665, %v605, 0
      %v715 = vsel %vm665, %v606, 0
      %v718 = vsel %vm665, %v607, 0
      %v721 = vsel %vm665, %v608, 0
      %v724 = vsel %vm665, %v609, 0
      %v727 = vsel %vm665, %v610, 0
      %v730 = vsel %vm665, %v611, 0
      %v733 = vsel %vm665, %v612, 0
      %v736 = vsel %vm665, %v613, 0
      %v739 = vsel %vm665, %v614, 0
      %v742 = vsel %vm665, %v615, 0
      %v745 = vsel %vm665, %v616, 0
      %v748 = vsel %vm665, %v617, 0
      %v751 = vsel %vm665, %v618, 0
      %v754 = vsel %vm665, %v619, 0
      %v757 = vsel %vm665, %v620, 0
      %v760 = vsel %vm665, %v621, 0
      %v763 = vsel %vm665, %v622, 0
      %v766 = vsel %vm665, %v623, 0
      %v769 = vsel %vm665, %v624, 0
      %v772 = vsel %vm665, %v625, 0
      %v775 = vsel %vm665, %v626, 0
      %v778 = vsel %vm665, %v627, 0
      %v781 = vsel %vm665, %v628, 0
      %v784 = vsel %vm665, %v629, 0
      %v787 = vsel %vm665, %v630, 0
      %v790 = vsel %vm665, %v631, 0
      %v793 = vsel %vm665, %v632, 0
      %v796 = vsel %vm665, %v633, 0
      %v799 = vsel %vm665, %v634, 0
      %v802 = vsel %vm665, %v635, 0
      %v805 = vsel %vm665, %v636, 0
      %v808 = vsel %vm665, %v637, 0
      %v811 = vsel %vm665, %v638, 0
      %v814 = vsel %vm665, %v639, 0
      %v817 = vsel %vm665, %v640, 0
      %v820 = vsel %vm665, %v641, 0
      %v823 = vsel %vm665, %v642, 0
      %v826 = vsel %vm665, %v643, 0
      %v829 = vsel %vm665, %v644, 0
      %v832 = vsel %vm665, %v645, 0
      %v835 = vsel %vm665, %v646, 0
      %v838 = vsel %vm665, %v647, 0
      %v841 = vsel %vm665, %v648, 0
      %v844 = vsel %vm665, %v649, 0
      %v847 = vsel %vm665, %v650, 0
      %v850 = vsel %vm665, %v651, 0
      %v853 = vsel %vm665, %v652, 0
      %v856 = vsel %vm665, %v653, 0
      %vm858 = vcmask 1044480
      %vm859 = vcmask 1045504
      %v860 = vsel %vm858, 4294967295, 65535
      %v861 = vsel %vm859, %v860, 0
      %v863 = vand.u32 %v663, %v861
      %865 = vmatpush.bf16.msra.mxu0 0
      %866 = vmatpush.bf16.msra.mxu0 0
      %867 = vmatpush.bf16.msra.mxu0 0
      %868 = vmatpush.bf16.msra.mxu0 0
      %869 = vmatpush.bf16.msra.mxu0 0
      %870 = vmatpush.bf16.msra.mxu0 0
      %871 = vmatpush.bf16.msra.mxu0 %v863
      %872 = vmatpush.bf16.msra.mxu0 %v662
      %873 = vmatmul.bf16.gmra.mxu0 %v667
      %v874 = vpop.f32.mrf.mxu0
      %v875 = vadd.f32 0.0, %v874
      %v876 = vpop.f32.mrf.mxu0
      %v877 = vadd.f32 0.0, %v876
      %878 = vmatmul.bf16.gmra.mxu0 %v670
      %v879 = vpop.f32.mrf.mxu0
      %v880 = vadd.f32 0.0, %v879
      %v881 = vpop.f32.mrf.mxu0
      %v882 = vadd.f32 0.0, %v881
      %883 = vmatmul.bf16.gmra.mxu0 %v673
      %v884 = vpop.f32.mrf.mxu0
      %v885 = vadd.f32 0.0, %v884
      %v886 = vpop.f32.mrf.mxu0
      %v887 = vadd.f32 0.0, %v886
      %888 = vmatmul.bf16.gmra.mxu0 %v676
      %v889 = vpop.f32.mrf.mxu0
      %v890 = vadd.f32 0.0, %v889
      %v891 = vpop.f32.mrf.mxu0
      %v892 = vadd.f32 0.0, %v891
      %893 = vmatmul.bf16.gmra.mxu0 %v679
      %v894 = vpop.f32.mrf.mxu0
      %v895 = vadd.f32 0.0, %v894
      %v896 = vpop.f32.mrf.mxu0
      %v897 = vadd.f32 0.0, %v896
      %898 = vmatmul.bf16.gmra.mxu0 %v682
      %v899 = vpop.f32.mrf.mxu0
      %v900 = vadd.f32 0.0, %v899
      %v901 = vpop.f32.mrf.mxu0
      %v902 = vadd.f32 0.0, %v901
      %903 = vmatmul.bf16.gmra.mxu0 %v685
      %v904 = vpop.f32.mrf.mxu0
      %v905 = vadd.f32 0.0, %v904
      %v906 = vpop.f32.mrf.mxu0
      %v907 = vadd.f32 0.0, %v906
      %908 = vmatmul.bf16.gmra.mxu0 %v688
      %v909 = vpop.f32.mrf.mxu0
      %v910 = vadd.f32 0.0, %v909
      %v911 = vpop.f32.mrf.mxu0
      %v912 = vadd.f32 0.0, %v911
      %913 = vmatmul.bf16.gmra.mxu0 %v691
      %v914 = vpop.f32.mrf.mxu0
      %v915 = vadd.f32 0.0, %v914
      %v916 = vpop.f32.mrf.mxu0
      %v917 = vadd.f32 0.0, %v916
      %918 = vmatmul.bf16.gmra.mxu0 %v694
      %v919 = vpop.f32.mrf.mxu0
      %v920 = vadd.f32 0.0, %v919
      %v921 = vpop.f32.mrf.mxu0
      %v922 = vadd.f32 0.0, %v921
      %923 = vmatmul.bf16.gmra.mxu0 %v697
      %v924 = vpop.f32.mrf.mxu0
      %v925 = vadd.f32 0.0, %v924
      %v926 = vpop.f32.mrf.mxu0
      %v927 = vadd.f32 0.0, %v926
      %928 = vmatmul.bf16.gmra.mxu0 %v700
      %v929 = vpop.f32.mrf.mxu0
      %v930 = vadd.f32 0.0, %v929
      %v931 = vpop.f32.mrf.mxu0
      %v932 = vadd.f32 0.0, %v931
      %933 = vmatmul.bf16.gmra.mxu0 %v703
      %v934 = vpop.f32.mrf.mxu0
      %v935 = vadd.f32 0.0, %v934
      %v936 = vpop.f32.mrf.mxu0
      %v937 = vadd.f32 0.0, %v936
      %938 = vmatmul.bf16.gmra.mxu0 %v706
      %v939 = vpop.f32.mrf.mxu0
      %v940 = vadd.f32 0.0, %v939
      %v941 = vpop.f32.mrf.mxu0
      %v942 = vadd.f32 0.0, %v941
      %943 = vmatmul.bf16.gmra.mxu0 %v709
      %v944 = vpop.f32.mrf.mxu0
      %v945 = vadd.f32 0.0, %v944
      %v946 = vpop.f32.mrf.mxu0
      %v947 = vadd.f32 0.0, %v946
      %948 = vmatmul.bf16.gmra.mxu0 %v712
      %v949 = vpop.f32.mrf.mxu0
      %v950 = vadd.f32 0.0, %v949
      %v951 = vpop.f32.mrf.mxu0
      %v952 = vadd.f32 0.0, %v951
      %953 = vmatmul.bf16.gmra.mxu0 %v715
      %v954 = vpop.f32.mrf.mxu0
      %v955 = vadd.f32 0.0, %v954
      %v956 = vpop.f32.mrf.mxu0
      %v957 = vadd.f32 0.0, %v956
      %958 = vmatmul.bf16.gmra.mxu0 %v718
      %v959 = vpop.f32.mrf.mxu0
      %v960 = vadd.f32 0.0, %v959
      %v961 = vpop.f32.mrf.mxu0
      %v962 = vadd.f32 0.0, %v961
      %963 = vmatmul.bf16.gmra.mxu0 %v721
      %v964 = vpop.f32.mrf.mxu0
      %v965 = vadd.f32 0.0, %v964
      %v966 = vpop.f32.mrf.mxu0
      %v967 = vadd.f32 0.0, %v966
      %968 = vmatmul.bf16.gmra.mxu0 %v724
      %v969 = vpop.f32.mrf.mxu0
      %v970 = vadd.f32 0.0, %v969
      %v971 = vpop.f32.mrf.mxu0
      %v972 = vadd.f32 0.0, %v971
      %973 = vmatmul.bf16.gmra.mxu0 %v727
      %v974 = vpop.f32.mrf.mxu0
      %v975 = vadd.f32 0.0, %v974
      %v976 = vpop.f32.mrf.mxu0
      %v977 = vadd.f32 0.0, %v976
      %978 = vmatmul.bf16.gmra.mxu0 %v730
      %v979 = vpop.f32.mrf.mxu0
      %v980 = vadd.f32 0.0, %v979
      %v981 = vpop.f32.mrf.mxu0
      %v982 = vadd.f32 0.0, %v981
      %983 = vmatmul.bf16.gmra.mxu0 %v733
      %v984 = vpop.f32.mrf.mxu0
      %v985 = vadd.f32 0.0, %v984
      %v986 = vpop.f32.mrf.mxu0
      %v987 = vadd.f32 0.0, %v986
      %988 = vmatmul.bf16.gmra.mxu0 %v736
      %v989 = vpop.f32.mrf.mxu0
      %v990 = vadd.f32 0.0, %v989
      %v991 = vpop.f32.mrf.mxu0
      %v992 = vadd.f32 0.0, %v991
      %993 = vmatmul.bf16.gmra.mxu0 %v739
      %v994 = vpop.f32.mrf.mxu0
      %v995 = vadd.f32 0.0, %v994
      %v996 = vpop.f32.mrf.mxu0
      %v997 = vadd.f32 0.0, %v996
      %998 = vmatmul.bf16.gmra.mxu0 %v742
      %v999 = vpop.f32.mrf.mxu0
      %v1000 = vadd.f32 0.0, %v999
      %v1001 = vpop.f32.mrf.mxu0
      %v1002 = vadd.f32 0.0, %v1001
      %1003 = vmatmul.bf16.gmra.mxu0 %v745
      %v1004 = vpop.f32.mrf.mxu0
      %v1005 = vadd.f32 0.0, %v1004
      %v1006 = vpop.f32.mrf.mxu0
      %v1007 = vadd.f32 0.0, %v1006
      %1008 = vmatmul.bf16.gmra.mxu0 %v748
      %v1009 = vpop.f32.mrf.mxu0
      %v1010 = vadd.f32 0.0, %v1009
      %v1011 = vpop.f32.mrf.mxu0
      %v1012 = vadd.f32 0.0, %v1011
      %1013 = vmatmul.bf16.gmra.mxu0 %v751
      %v1014 = vpop.f32.mrf.mxu0
      %v1015 = vadd.f32 0.0, %v1014
      %v1016 = vpop.f32.mrf.mxu0
      %v1017 = vadd.f32 0.0, %v1016
      %1018 = vmatmul.bf16.gmra.mxu0 %v754
      %v1019 = vpop.f32.mrf.mxu0
      %v1020 = vadd.f32 0.0, %v1019
      %v1021 = vpop.f32.mrf.mxu0
      %v1022 = vadd.f32 0.0, %v1021
      %1023 = vmatmul.bf16.gmra.mxu0 %v757
      %v1024 = vpop.f32.mrf.mxu0
      %v1025 = vadd.f32 0.0, %v1024
      %v1026 = vpop.f32.mrf.mxu0
      %v1027 = vadd.f32 0.0, %v1026
      %1028 = vmatmul.bf16.gmra.mxu0 %v760
      %v1029 = vpop.f32.mrf.mxu0
      %v1030 = vadd.f32 0.0, %v1029
      %v1031 = vpop.f32.mrf.mxu0
      %v1032 = vadd.f32 0.0, %v1031
      %1033 = vmatmul.bf16.gmra.mxu0 %v763
      %v1034 = vpop.f32.mrf.mxu0
      %v1035 = vadd.f32 0.0, %v1034
      %v1036 = vpop.f32.mrf.mxu0
      %v1037 = vadd.f32 0.0, %v1036
      %1038 = vmatmul.bf16.gmra.mxu0 %v766
      %v1039 = vpop.f32.mrf.mxu0
      %v1040 = vadd.f32 0.0, %v1039
      %v1041 = vpop.f32.mrf.mxu0
      %v1042 = vadd.f32 0.0, %v1041
      %1043 = vmatmul.bf16.gmra.mxu0 %v769
      %v1044 = vpop.f32.mrf.mxu0
      %v1045 = vadd.f32 0.0, %v1044
      %v1046 = vpop.f32.mrf.mxu0
      %v1047 = vadd.f32 0.0, %v1046
      %1048 = vmatmul.bf16.gmra.mxu0 %v772
      %v1049 = vpop.f32.mrf.mxu0
      %v1050 = vadd.f32 0.0, %v1049
      %v1051 = vpop.f32.mrf.mxu0
      %v1052 = vadd.f32 0.0, %v1051
      %1053 = vmatmul.bf16.gmra.mxu0 %v775
      %v1054 = vpop.f32.mrf.mxu0
      %v1055 = vadd.f32 0.0, %v1054
      %v1056 = vpop.f32.mrf.mxu0
      %v1057 = vadd.f32 0.0, %v1056
      %1058 = vmatmul.bf16.gmra.mxu0 %v778
      %v1059 = vpop.f32.mrf.mxu0
      %v1060 = vadd.f32 0.0, %v1059
      %v1061 = vpop.f32.mrf.mxu0
      %v1062 = vadd.f32 0.0, %v1061
      %1063 = vmatmul.bf16.gmra.mxu0 %v781
      %v1064 = vpop.f32.mrf.mxu0
      %v1065 = vadd.f32 0.0, %v1064
      %v1066 = vpop.f32.mrf.mxu0
      %v1067 = vadd.f32 0.0, %v1066
      %1068 = vmatmul.bf16.gmra.mxu0 %v784
      %v1069 = vpop.f32.mrf.mxu0
      %v1070 = vadd.f32 0.0, %v1069
      %v1071 = vpop.f32.mrf.mxu0
      %v1072 = vadd.f32 0.0, %v1071
      %1073 = vmatmul.bf16.gmra.mxu0 %v787
      %v1074 = vpop.f32.mrf.mxu0
      %v1075 = vadd.f32 0.0, %v1074
      %v1076 = vpop.f32.mrf.mxu0
      %v1077 = vadd.f32 0.0, %v1076
      %1078 = vmatmul.bf16.gmra.mxu0 %v790
      %v1079 = vpop.f32.mrf.mxu0
      %v1080 = vadd.f32 0.0, %v1079
      %v1081 = vpop.f32.mrf.mxu0
      %v1082 = vadd.f32 0.0, %v1081
      %1083 = vmatmul.bf16.gmra.mxu0 %v793
      %v1084 = vpop.f32.mrf.mxu0
      %v1085 = vadd.f32 0.0, %v1084
      %v1086 = vpop.f32.mrf.mxu0
      %v1087 = vadd.f32 0.0, %v1086
      %1088 = vmatmul.bf16.gmra.mxu0 %v796
      %v1089 = vpop.f32.mrf.mxu0
      %v1090 = vadd.f32 0.0, %v1089
      %v1091 = vpop.f32.mrf.mxu0
      %v1092 = vadd.f32 0.0, %v1091
      %1093 = vmatmul.bf16.gmra.mxu0 %v799
      %v1094 = vpop.f32.mrf.mxu0
      %v1095 = vadd.f32 0.0, %v1094
      %v1096 = vpop.f32.mrf.mxu0
      %v1097 = vadd.f32 0.0, %v1096
      %1098 = vmatmul.bf16.gmra.mxu0 %v802
      %v1099 = vpop.f32.mrf.mxu0
      %v1100 = vadd.f32 0.0, %v1099
      %v1101 = vpop.f32.mrf.mxu0
      %v1102 = vadd.f32 0.0, %v1101
      %1103 = vmatmul.bf16.gmra.mxu0 %v805
      %v1104 = vpop.f32.mrf.mxu0
      %v1105 = vadd.f32 0.0, %v1104
      %v1106 = vpop.f32.mrf.mxu0
      %v1107 = vadd.f32 0.0, %v1106
      %1108 = vmatmul.bf16.gmra.mxu0 %v808
      %v1109 = vpop.f32.mrf.mxu0
      %v1110 = vadd.f32 0.0, %v1109
      %v1111 = vpop.f32.mrf.mxu0
      %v1112 = vadd.f32 0.0, %v1111
      %1113 = vmatmul.bf16.gmra.mxu0 %v811
      %v1114 = vpop.f32.mrf.mxu0
      %v1115 = vadd.f32 0.0, %v1114
      %v1116 = vpop.f32.mrf.mxu0
      %v1117 = vadd.f32 0.0, %v1116
      %1118 = vmatmul.bf16.gmra.mxu0 %v814
      %v1119 = vpop.f32.mrf.mxu0
      %v1120 = vadd.f32 0.0, %v1119
      %v1121 = vpop.f32.mrf.mxu0
      %v1122 = vadd.f32 0.0, %v1121
      %1123 = vmatmul.bf16.gmra.mxu0 %v817
      %v1124 = vpop.f32.mrf.mxu0
      %v1125 = vadd.f32 0.0, %v1124
      %v1126 = vpop.f32.mrf.mxu0
      %v1127 = vadd.f32 0.0, %v1126
      %1128 = vmatmul.bf16.gmra.mxu0 %v820
      %v1129 = vpop.f32.mrf.mxu0
      %v1130 = vadd.f32 0.0, %v1129
      %v1131 = vpop.f32.mrf.mxu0
      %v1132 = vadd.f32 0.0, %v1131
      %1133 = vmatmul.bf16.gmra.mxu0 %v823
      %v1134 = vpop.f32.mrf.mxu0
      %v1135 = vadd.f32 0.0, %v1134
      %v1136 = vpop.f32.mrf.mxu0
      %v1137 = vadd.f32 0.0, %v1136
      %1138 = vmatmul.bf16.gmra.mxu0 %v826
      %v1139 = vpop.f32.mrf.mxu0
      %v1140 = vadd.f32 0.0, %v1139
      %v1141 = vpop.f32.mrf.mxu0
      %v1142 = vadd.f32 0.0, %v1141
      %1143 = vmatmul.bf16.gmra.mxu0 %v829
      %v1144 = vpop.f32.mrf.mxu0
      %v1145 = vadd.f32 0.0, %v1144
      %v1146 = vpop.f32.mrf.mxu0
      %v1147 = vadd.f32 0.0, %v1146
      %1148 = vmatmul.bf16.gmra.mxu0 %v832
      %v1149 = vpop.f32.mrf.mxu0
      %v1150 = vadd.f32 0.0, %v1149
      %v1151 = vpop.f32.mrf.mxu0
      %v1152 = vadd.f32 0.0, %v1151
      %1153 = vmatmul.bf16.gmra.mxu0 %v835
      %v1154 = vpop.f32.mrf.mxu0
      %v1155 = vadd.f32 0.0, %v1154
      %v1156 = vpop.f32.mrf.mxu0
      %v1157 = vadd.f32 0.0, %v1156
      %1158 = vmatmul.bf16.gmra.mxu0 %v838
      %v1159 = vpop.f32.mrf.mxu0
      %v1160 = vadd.f32 0.0, %v1159
      %v1161 = vpop.f32.mrf.mxu0
      %v1162 = vadd.f32 0.0, %v1161
      %1163 = vmatmul.bf16.gmra.mxu0 %v841
      %v1164 = vpop.f32.mrf.mxu0
      %v1165 = vadd.f32 0.0, %v1164
      %v1166 = vpop.f32.mrf.mxu0
      %v1167 = vadd.f32 0.0, %v1166
      %1168 = vmatmul.bf16.gmra.mxu0 %v844
      %v1169 = vpop.f32.mrf.mxu0
      %v1170 = vadd.f32 0.0, %v1169
      %v1171 = vpop.f32.mrf.mxu0
      %v1172 = vadd.f32 0.0, %v1171
      %1173 = vmatmul.bf16.gmra.mxu0 %v847
      %v1174 = vpop.f32.mrf.mxu0
      %v1175 = vadd.f32 0.0, %v1174
      %v1176 = vpop.f32.mrf.mxu0
      %v1177 = vadd.f32 0.0, %v1176
      %1178 = vmatmul.bf16.gmra.mxu0 %v850
      %v1179 = vpop.f32.mrf.mxu0
      %v1180 = vadd.f32 0.0, %v1179
      %v1181 = vpop.f32.mrf.mxu0
      %v1182 = vadd.f32 0.0, %v1181
      %1183 = vmatmul.bf16.gmra.mxu0 %v853
      %v1184 = vpop.f32.mrf.mxu0
      %v1185 = vadd.f32 0.0, %v1184
      %v1186 = vpop.f32.mrf.mxu0
      %v1187 = vadd.f32 0.0, %v1186
      %1188 = vmatmul.bf16.gmra.mxu0 %v856
      %v1189 = vpop.f32.mrf.mxu0
      %v1190 = vadd.f32 0.0, %v1189
      %v1191 = vpop.f32.mrf.mxu0
      %v1192 = vadd.f32 0.0, %v1191
      %1193 = vdwg.mxu0
      %v1194 = vld [vmem:[%s2] sm:$0x1]
      %v1196 = vperm.slane %v1194, 0
      %v1198 = vmul.f32 %v875, %v1196
      %v1199 = vmul.f32 %v877, %v1196
      %v1200 = vmul.f32 %v880, %v1196
      %v1201 = vmul.f32 %v882, %v1196
      %v1202 = vmul.f32 %v885, %v1196
      %v1203 = vmul.f32 %v887, %v1196
      %v1204 = vmul.f32 %v890, %v1196
      %v1205 = vmul.f32 %v892, %v1196
      %v1206 = vmul.f32 %v895, %v1196
      %v1207 = vmul.f32 %v897, %v1196
      %v1208 = vmul.f32 %v900, %v1196
      %v1209 = vmul.f32 %v902, %v1196
      %v1210 = vmul.f32 %v905, %v1196
      %v1211 = vmul.f32 %v907, %v1196
      %v1212 = vmul.f32 %v910, %v1196
      %v1213 = vmul.f32 %v912, %v1196
      %v1214 = vmul.f32 %v915, %v1196
      %v1215 = vmul.f32 %v917, %v1196
      %v1216 = vmul.f32 %v920, %v1196
      %v1217 = vmul.f32 %v922, %v1196
      %v1218 = vmul.f32 %v925, %v1196
      %v1219 = vmul.f32 %v927, %v1196
      %v1220 = vmul.f32 %v930, %v1196
      %v1221 = vmul.f32 %v932, %v1196
      %v1222 = vmul.f32 %v935, %v1196
      %v1223 = vmul.f32 %v937, %v1196
      %v1224 = vmul.f32 %v940, %v1196
      %v1225 = vmul.f32 %v942, %v1196
      %v1226 = vmul.f32 %v945, %v1196
      %v1227 = vmul.f32 %v947, %v1196
      %v1228 = vmul.f32 %v950, %v1196
      %v1229 = vmul.f32 %v952, %v1196
      %v1230 = vmul.f32 %v955, %v1196
      %v1231 = vmul.f32 %v957, %v1196
      %v1232 = vmul.f32 %v960, %v1196
      %v1233 = vmul.f32 %v962, %v1196
      %v1234 = vmul.f32 %v965, %v1196
      %v1235 = vmul.f32 %v967, %v1196
      %v1236 = vmul.f32 %v970, %v1196
      %v1237 = vmul.f32 %v972, %v1196
      %v1238 = vmul.f32 %v975, %v1196
      %v1239 = vmul.f32 %v977, %v1196
      %v1240 = vmul.f32 %v980, %v1196
      %v1241 = vmul.f32 %v982, %v1196
      %v1242 = vmul.f32 %v985, %v1196
      %v1243 = vmul.f32 %v987, %v1196
      %v1244 = vmul.f32 %v990, %v1196
      %v1245 = vmul.f32 %v992, %v1196
      %v1246 = vmul.f32 %v995, %v1196
      %v1247 = vmul.f32 %v997, %v1196
      %v1248 = vmul.f32 %v1000, %v1196
      %v1249 = vmul.f32 %v1002, %v1196
      %v1250 = vmul.f32 %v1005, %v1196
      %v1251 = vmul.f32 %v1007, %v1196
      %v1252 = vmul.f32 %v1010, %v1196
      %v1253 = vmul.f32 %v1012, %v1196
      %v1254 = vmul.f32 %v1015, %v1196
      %v1255 = vmul.f32 %v1017, %v1196
      %v1256 = vmul.f32 %v1020, %v1196
      %v1257 = vmul.f32 %v1022, %v1196
      %v1258 = vmul.f32 %v1025, %v1196
      %v1259 = vmul.f32 %v1027, %v1196
      %v1260 = vmul.f32 %v1030, %v1196
      %v1261 = vmul.f32 %v1032, %v1196
      %v1262 = vmul.f32 %v1035, %v1196
      %v1263 = vmul.f32 %v1037, %v1196
      %v1264 = vmul.f32 %v1040, %v1196
      %v1265 = vmul.f32 %v1042, %v1196
      %v1266 = vmul.f32 %v1045, %v1196
      %v1267 = vmul.f32 %v1047, %v1196
      %v1268 = vmul.f32 %v1050, %v1196
      %v1269 = vmul.f32 %v1052, %v1196
      %v1270 = vmul.f32 %v1055, %v1196
      %v1271 = vmul.f32 %v1057, %v1196
      %v1272 = vmul.f32 %v1060, %v1196
      %v1273 = vmul.f32 %v1062, %v1196
      %v1274 = vmul.f32 %v1065, %v1196
      %v1275 = vmul.f32 %v1067, %v1196
      %v1276 = vmul.f32 %v1070, %v1196
      %v1277 = vmul.f32 %v1072, %v1196
      %v1278 = vmul.f32 %v1075, %v1196
      %v1279 = vmul.f32 %v1077, %v1196
      %v1280 = vmul.f32 %v1080, %v1196
      %v1281 = vmul.f32 %v1082, %v1196
      %v1282 = vmul.f32 %v1085, %v1196
      %v1283 = vmul.f32 %v1087, %v1196
      %v1284 = vmul.f32 %v1090, %v1196
      %v1285 = vmul.f32 %v1092, %v1196
      %v1286 = vmul.f32 %v1095, %v1196
      %v1287 = vmul.f32 %v1097, %v1196
      %v1288 = vmul.f32 %v1100, %v1196
      %v1289 = vmul.f32 %v1102, %v1196
      %v1290 = vmul.f32 %v1105, %v1196
      %v1291 = vmul.f32 %v1107, %v1196
      %v1292 = vmul.f32 %v1110, %v1196
      %v1293 = vmul.f32 %v1112, %v1196
      %v1294 = vmul.f32 %v1115, %v1196
      %v1295 = vmul.f32 %v1117, %v1196
      %v1296 = vmul.f32 %v1120, %v1196
      %v1297 = vmul.f32 %v1122, %v1196
      %v1298 = vmul.f32 %v1125, %v1196
      %v1299 = vmul.f32 %v1127, %v1196
      %v1300 = vmul.f32 %v1130, %v1196
      %v1301 = vmul.f32 %v1132, %v1196
      %v1302 = vmul.f32 %v1135, %v1196
      %v1303 = vmul.f32 %v1137, %v1196
      %v1304 = vmul.f32 %v1140, %v1196
      %v1305 = vmul.f32 %v1142, %v1196
      %v1306 = vmul.f32 %v1145, %v1196
      %v1307 = vmul.f32 %v1147, %v1196
      %v1308 = vmul.f32 %v1150, %v1196
      %v1309 = vmul.f32 %v1152, %v1196
      %v1310 = vmul.f32 %v1155, %v1196
      %v1311 = vmul.f32 %v1157, %v1196
      %v1312 = vmul.f32 %v1160, %v1196
      %v1313 = vmul.f32 %v1162, %v1196
      %v1314 = vmul.f32 %v1165, %v1196
      %v1315 = vmul.f32 %v1167, %v1196
      %v1316 = vmul.f32 %v1170, %v1196
      %v1317 = vmul.f32 %v1172, %v1196
      %v1318 = vmul.f32 %v1175, %v1196
      %v1319 = vmul.f32 %v1177, %v1196
      %v1320 = vmul.f32 %v1180, %v1196
      %v1321 = vmul.f32 %v1182, %v1196
      %v1322 = vmul.f32 %v1185, %v1196
      %v1323 = vmul.f32 %v1187, %v1196
      %v1324 = vmul.f32 %v1190, %v1196
      %v1325 = vmul.f32 %v1192, %v1196
      %v1326 = vld [vmem:[%s3] sm:$0x1]
      %v1328 = vperm.slane %v1326, 0
      %v1330 = vadd.f32 %v1198, %v1328
      %v1331 = vadd.f32 %v1199, %v1328
      %v1332 = vadd.f32 %v1200, %v1328
      %v1333 = vadd.f32 %v1201, %v1328
      %v1334 = vadd.f32 %v1202, %v1328
      %v1335 = vadd.f32 %v1203, %v1328
      %v1336 = vadd.f32 %v1204, %v1328
      %v1337 = vadd.f32 %v1205, %v1328
      %v1338 = vadd.f32 %v1206, %v1328
      %v1339 = vadd.f32 %v1207, %v1328
      %v1340 = vadd.f32 %v1208, %v1328
      %v1341 = vadd.f32 %v1209, %v1328
      %v1342 = vadd.f32 %v1210, %v1328
      %v1343 = vadd.f32 %v1211, %v1328
      %v1344 = vadd.f32 %v1212, %v1328
      %v1345 = vadd.f32 %v1213, %v1328
      %v1346 = vadd.f32 %v1214, %v1328
      %v1347 = vadd.f32 %v1215, %v1328
      %v1348 = vadd.f32 %v1216, %v1328
      %v1349 = vadd.f32 %v1217, %v1328
      %v1350 = vadd.f32 %v1218, %v1328
      %v1351 = vadd.f32 %v1219, %v1328
      %v1352 = vadd.f32 %v1220, %v1328
      %v1353 = vadd.f32 %v1221, %v1328
      %v1354 = vadd.f32 %v1222, %v1328
      %v1355 = vadd.f32 %v1223, %v1328
      %v1356 = vadd.f32 %v1224, %v1328
      %v1357 = vadd.f32 %v1225, %v1328
      %v1358 = vadd.f32 %v1226, %v1328
      %v1359 = vadd.f32 %v1227, %v1328
      %v1360 = vadd.f32 %v1228, %v1328
      %v1361 = vadd.f32 %v1229, %v1328
      %v1362 = vadd.f32 %v1230, %v1328
      %v1363 = vadd.f32 %v1231, %v1328
      %v1364 = vadd.f32 %v1232, %v1328
      %v1365 = vadd.f32 %v1233, %v1328
      %v1366 = vadd.f32 %v1234, %v1328
      %v1367 = vadd.f32 %v1235, %v1328
      %v1368 = vadd.f32 %v1236, %v1328
      %v1369 = vadd.f32 %v1237, %v1328
      %v1370 = vadd.f32 %v1238, %v1328
      %v1371 = vadd.f32 %v1239, %v1328
      %v1372 = vadd.f32 %v1240, %v1328
      %v1373 = vadd.f32 %v1241, %v1328
      %v1374 = vadd.f32 %v1242, %v1328
      %v1375 = vadd.f32 %v1243, %v1328
      %v1376 = vadd.f32 %v1244, %v1328
      %v1377 = vadd.f32 %v1245, %v1328
      %v1378 = vadd.f32 %v1246, %v1328
      %v1379 = vadd.f32 %v1247, %v1328
      %v1380 = vadd.f32 %v1248, %v1328
      %v1381 = vadd.f32 %v1249, %v1328
      %v1382 = vadd.f32 %v1250, %v1328
      %v1383 = vadd.f32 %v1251, %v1328
      %v1384 = vadd.f32 %v1252, %v1328
      %v1385 = vadd.f32 %v1253, %v1328
      %v1386 = vadd.f32 %v1254, %v1328
      %v1387 = vadd.f32 %v1255, %v1328
      %v1388 = vadd.f32 %v1256, %v1328
      %v1389 = vadd.f32 %v1257, %v1328
      %v1390 = vadd.f32 %v1258, %v1328
      %v1391 = vadd.f32 %v1259, %v1328
      %v1392 = vadd.f32 %v1260, %v1328
      %v1393 = vadd.f32 %v1261, %v1328
      %v1394 = vadd.f32 %v1262, %v1328
      %v1395 = vadd.f32 %v1263, %v1328
      %v1396 = vadd.f32 %v1264, %v1328
      %v1397 = vadd.f32 %v1265, %v1328
      %v1398 = vadd.f32 %v1266, %v1328
      %v1399 = vadd.f32 %v1267, %v1328
      %v1400 = vadd.f32 %v1268, %v1328
      %v1401 = vadd.f32 %v1269, %v1328
      %v1402 = vadd.f32 %v1270, %v1328
      %v1403 = vadd.f32 %v1271, %v1328
      %v1404 = vadd.f32 %v1272, %v1328
      %v1405 = vadd.f32 %v1273, %v1328
      %v1406 = vadd.f32 %v1274, %v1328
      %v1407 = vadd.f32 %v1275, %v1328
      %v1408 = vadd.f32 %v1276, %v1328
      %v1409 = vadd.f32 %v1277, %v1328
      %v1410 = vadd.f32 %v1278, %v1328
      %v1411 = vadd.f32 %v1279, %v1328
      %v1412 = vadd.f32 %v1280, %v1328
      %v1413 = vadd.f32 %v1281, %v1328
      %v1414 = vadd.f32 %v1282, %v1328
      %v1415 = vadd.f32 %v1283, %v1328
      %v1416 = vadd.f32 %v1284, %v1328
      %v1417 = vadd.f32 %v1285, %v1328
      %v1418 = vadd.f32 %v1286, %v1328
      %v1419 = vadd.f32 %v1287, %v1328
      %v1420 = vadd.f32 %v1288, %v1328
      %v1421 = vadd.f32 %v1289, %v1328
      %v1422 = vadd.f32 %v1290, %v1328
      %v1423 = vadd.f32 %v1291, %v1328
      %v1424 = vadd.f32 %v1292, %v1328
      %v1425 = vadd.f32 %v1293, %v1328
      %v1426 = vadd.f32 %v1294, %v1328
      %v1427 = vadd.f32 %v1295, %v1328
      %v1428 = vadd.f32 %v1296, %v1328
      %v1429 = vadd.f32 %v1297, %v1328
      %v1430 = vadd.f32 %v1298, %v1328
      %v1431 = vadd.f32 %v1299, %v1328
      %v1432 = vadd.f32 %v1300, %v1328
      %v1433 = vadd.f32 %v1301, %v1328
      %v1434 = vadd.f32 %v1302, %v1328
      %v1435 = vadd.f32 %v1303, %v1328
      %v1436 = vadd.f32 %v1304, %v1328
      %v1437 = vadd.f32 %v1305, %v1328
      %v1438 = vadd.f32 %v1306, %v1328
      %v1439 = vadd.f32 %v1307, %v1328
      %v1440 = vadd.f32 %v1308, %v1328
      %v1441 = vadd.f32 %v1309, %v1328
      %v1442 = vadd.f32 %v1310, %v1328
      %v1443 = vadd.f32 %v1311, %v1328
      %v1444 = vadd.f32 %v1312, %v1328
      %v1445 = vadd.f32 %v1313, %v1328
      %v1446 = vadd.f32 %v1314, %v1328
      %v1447 = vadd.f32 %v1315, %v1328
      %v1448 = vadd.f32 %v1316, %v1328
      %v1449 = vadd.f32 %v1317, %v1328
      %v1450 = vadd.f32 %v1318, %v1328
      %v1451 = vadd.f32 %v1319, %v1328
      %v1452 = vadd.f32 %v1320, %v1328
      %v1453 = vadd.f32 %v1321, %v1328
      %v1454 = vadd.f32 %v1322, %v1328
      %v1455 = vadd.f32 %v1323, %v1328
      %v1456 = vadd.f32 %v1324, %v1328
      %v1457 = vadd.f32 %v1325, %v1328
      %v1458 = vmax.f32 %v1330, 0.0
      %v1459 = vmax.f32 %v1331, 0.0
      %v1460 = vmax.f32 %v1332, 0.0
      %v1461 = vmax.f32 %v1333, 0.0
      %v1462 = vmax.f32 %v1334, 0.0
      %v1463 = vmax.f32 %v1335, 0.0
      %v1464 = vmax.f32 %v1336, 0.0
      %v1465 = vmax.f32 %v1337, 0.0
      %v1466 = vmax.f32 %v1338, 0.0
      %v1467 = vmax.f32 %v1339, 0.0
      %v1468 = vmax.f32 %v1340, 0.0
      %v1469 = vmax.f32 %v1341, 0.0
      %v1470 = vmax.f32 %v1342, 0.0
      %v1471 = vmax.f32 %v1343, 0.0
      %v1472 = vmax.f32 %v1344, 0.0
      %v1473 = vmax.f32 %v1345, 0.0
      %v1474 = vmax.f32 %v1346, 0.0
      %v1475 = vmax.f32 %v1347, 0.0
      %v1476 = vmax.f32 %v1348, 0.0
      %v1477 = vmax.f32 %v1349, 0.0
      %v1478 = vmax.f32 %v1350, 0.0
      %v1479 = vmax.f32 %v1351, 0.0
      %v1480 = vmax.f32 %v1352, 0.0
      %v1481 = vmax.f32 %v1353, 0.0
      %v1482 = vmax.f32 %v1354, 0.0
      %v1483 = vmax.f32 %v1355, 0.0
      %v1484 = vmax.f32 %v1356, 0.0
      %v1485 = vmax.f32 %v1357, 0.0
      %v1486 = vmax.f32 %v1358, 0.0
      %v1487 = vmax.f32 %v1359, 0.0
      %v1488 = vmax.f32 %v1360, 0.0
      %v1489 = vmax.f32 %v1361, 0.0
      %v1490 = vmax.f32 %v1362, 0.0
      %v1491 = vmax.f32 %v1363, 0.0
      %v1492 = vmax.f32 %v1364, 0.0
      %v1493 = vmax.f32 %v1365, 0.0
      %v1494 = vmax.f32 %v1366, 0.0
      %v1495 = vmax.f32 %v1367, 0.0
      %v1496 = vmax.f32 %v1368, 0.0
      %v1497 = vmax.f32 %v1369, 0.0
      %v1498 = vmax.f32 %v1370, 0.0
      %v1499 = vmax.f32 %v1371, 0.0
      %v1500 = vmax.f32 %v1372, 0.0
      %v1501 = vmax.f32 %v1373, 0.0
      %v1502 = vmax.f32 %v1374, 0.0
      %v1503 = vmax.f32 %v1375, 0.0
      %v1504 = vmax.f32 %v1376, 0.0
      %v1505 = vmax.f32 %v1377, 0.0
      %v1506 = vmax.f32 %v1378, 0.0
      %v1507 = vmax.f32 %v1379, 0.0
      %v1508 = vmax.f32 %v1380, 0.0
      %v1509 = vmax.f32 %v1381, 0.0
      %v1510 = vmax.f32 %v1382, 0.0
      %v1511 = vmax.f32 %v1383, 0.0
      %v1512 = vmax.f32 %v1384, 0.0
      %v1513 = vmax.f32 %v1385, 0.0
      %v1514 = vmax.f32 %v1386, 0.0
      %v1515 = vmax.f32 %v1387, 0.0
      %v1516 = vmax.f32 %v1388, 0.0
      %v1517 = vmax.f32 %v1389, 0.0
      %v1518 = vmax.f32 %v1390, 0.0
      %v1519 = vmax.f32 %v1391, 0.0
      %v1520 = vmax.f32 %v1392, 0.0
      %v1521 = vmax.f32 %v1393, 0.0
      %v1522 = vmax.f32 %v1394, 0.0
      %v1523 = vmax.f32 %v1395, 0.0
      %v1524 = vmax.f32 %v1396, 0.0
      %v1525 = vmax.f32 %v1397, 0.0
      %v1526 = vmax.f32 %v1398, 0.0
      %v1527 = vmax.f32 %v1399, 0.0
      %v1528 = vmax.f32 %v1400, 0.0
      %v1529 = vmax.f32 %v1401, 0.0
      %v1530 = vmax.f32 %v1402, 0.0
      %v1531 = vmax.f32 %v1403, 0.0
      %v1532 = vmax.f32 %v1404, 0.0
      %v1533 = vmax.f32 %v1405, 0.0
      %v1534 = vmax.f32 %v1406, 0.0
      %v1535 = vmax.f32 %v1407, 0.0
      %v1536 = vmax.f32 %v1408, 0.0
      %v1537 = vmax.f32 %v1409, 0.0
      %v1538 = vmax.f32 %v1410, 0.0
      %v1539 = vmax.f32 %v1411, 0.0
      %v1540 = vmax.f32 %v1412, 0.0
      %v1541 = vmax.f32 %v1413, 0.0
      %v1542 = vmax.f32 %v1414, 0.0
      %v1543 = vmax.f32 %v1415, 0.0
      %v1544 = vmax.f32 %v1416, 0.0
      %v1545 = vmax.f32 %v1417, 0.0
      %v1546 = vmax.f32 %v1418, 0.0
      %v1547 = vmax.f32 %v1419, 0.0
      %v1548 = vmax.f32 %v1420, 0.0
      %v1549 = vmax.f32 %v1421, 0.0
      %v1550 = vmax.f32 %v1422, 0.0
      %v1551 = vmax.f32 %v1423, 0.0
      %v1552 = vmax.f32 %v1424, 0.0
      %v1553 = vmax.f32 %v1425, 0.0
      %v1554 = vmax.f32 %v1426, 0.0
      %v1555 = vmax.f32 %v1427, 0.0
      %v1556 = vmax.f32 %v1428, 0.0
      %v1557 = vmax.f32 %v1429, 0.0
      %v1558 = vmax.f32 %v1430, 0.0
      %v1559 = vmax.f32 %v1431, 0.0
      %v1560 = vmax.f32 %v1432, 0.0
      %v1561 = vmax.f32 %v1433, 0.0
      %v1562 = vmax.f32 %v1434, 0.0
      %v1563 = vmax.f32 %v1435, 0.0
      %v1564 = vmax.f32 %v1436, 0.0
      %v1565 = vmax.f32 %v1437, 0.0
      %v1566 = vmax.f32 %v1438, 0.0
      %v1567 = vmax.f32 %v1439, 0.0
      %v1568 = vmax.f32 %v1440, 0.0
      %v1569 = vmax.f32 %v1441, 0.0
      %v1570 = vmax.f32 %v1442, 0.0
      %v1571 = vmax.f32 %v1443, 0.0
      %v1572 = vmax.f32 %v1444, 0.0
      %v1573 = vmax.f32 %v1445, 0.0
      %v1574 = vmax.f32 %v1446, 0.0
      %v1575 = vmax.f32 %v1447, 0.0
      %v1576 = vmax.f32 %v1448, 0.0
      %v1577 = vmax.f32 %v1449, 0.0
      %v1578 = vmax.f32 %v1450, 0.0
      %v1579 = vmax.f32 %v1451, 0.0
      %v1580 = vmax.f32 %v1452, 0.0
      %v1581 = vmax.f32 %v1453, 0.0
      %v1582 = vmax.f32 %v1454, 0.0
      %v1583 = vmax.f32 %v1455, 0.0
      %v1584 = vmax.f32 %v1456, 0.0
      %v1585 = vmax.f32 %v1457, 0.0
      %v1586 = vpack.c.bf16 %v1458, %v1458
      %v1587 = vpack.c.bf16 %v1459, %v1459
      %v1588 = vpack.c.bf16 %v1460, %v1460
      %v1589 = vpack.c.bf16 %v1461, %v1461
      %v1590 = vpack.c.bf16 %v1462, %v1462
      %v1591 = vpack.c.bf16 %v1463, %v1463
      %v1592 = vpack.c.bf16 %v1464, %v1464
      %v1593 = vpack.c.bf16 %v1465, %v1465
      %v1594 = vpack.c.bf16 %v1466, %v1466
      %v1595 = vpack.c.bf16 %v1467, %v1467
      %v1596 = vpack.c.bf16 %v1468, %v1468
      %v1597 = vpack.c.bf16 %v1469, %v1469
      %v1598 = vpack.c.bf16 %v1470, %v1470
      %v1599 = vpack.c.bf16 %v1471, %v1471
      %v1600 = vpack.c.bf16 %v1472, %v1472
      %v1601 = vpack.c.bf16 %v1473, %v1473
      %v1602 = vpack.c.bf16 %v1474, %v1474
      %v1603 = vpack.c.bf16 %v1475, %v1475
      %v1604 = vpack.c.bf16 %v1476, %v1476
      %v1605 = vpack.c.bf16 %v1477, %v1477
      %v1606 = vpack.c.bf16 %v1478, %v1478
      %v1607 = vpack.c.bf16 %v1479, %v1479
      %v1608 = vpack.c.bf16 %v1480, %v1480
      %v1609 = vpack.c.bf16 %v1481, %v1481
      %v1610 = vpack.c.bf16 %v1482, %v1482
      %v1611 = vpack.c.bf16 %v1483, %v1483
      %v1612 = vpack.c.bf16 %v1484, %v1484
      %v1613 = vpack.c.bf16 %v1485, %v1485
      %v1614 = vpack.c.bf16 %v1486, %v1486
      %v1615 = vpack.c.bf16 %v1487, %v1487
      %v1616 = vpack.c.bf16 %v1488, %v1488
      %v1617 = vpack.c.bf16 %v1489, %v1489
      %v1618 = vpack.c.bf16 %v1490, %v1490
      %v1619 = vpack.c.bf16 %v1491, %v1491
      %v1620 = vpack.c.bf16 %v1492, %v1492
      %v1621 = vpack.c.bf16 %v1493, %v1493
      %v1622 = vpack.c.bf16 %v1494, %v1494
      %v1623 = vpack.c.bf16 %v1495, %v1495
      %v1624 = vpack.c.bf16 %v1496, %v1496
      %v1625 = vpack.c.bf16 %v1497, %v1497
      %v1626 = vpack.c.bf16 %v1498, %v1498
      %v1627 = vpack.c.bf16 %v1499, %v1499
      %v1628 = vpack.c.bf16 %v1500, %v1500
      %v1629 = vpack.c.bf16 %v1501, %v1501
      %v1630 = vpack.c.bf16 %v1502, %v1502
      %v1631 = vpack.c.bf16 %v1503, %v1503
      %v1632 = vpack.c.bf16 %v1504, %v1504
      %v1633 = vpack.c.bf16 %v1505, %v1505
      %v1634 = vpack.c.bf16 %v1506, %v1506
      %v1635 = vpack.c.bf16 %v1507, %v1507
      %v1636 = vpack.c.bf16 %v1508, %v1508
      %v1637 = vpack.c.bf16 %v1509, %v1509
      %v1638 = vpack.c.bf16 %v1510, %v1510
      %v1639 = vpack.c.bf16 %v1511, %v1511
      %v1640 = vpack.c.bf16 %v1512, %v1512
      %v1641 = vpack.c.bf16 %v1513, %v1513
      %v1642 = vpack.c.bf16 %v1514, %v1514
      %v1643 = vpack.c.bf16 %v1515, %v1515
      %v1644 = vpack.c.bf16 %v1516, %v1516
      %v1645 = vpack.c.bf16 %v1517, %v1517
      %v1646 = vpack.c.bf16 %v1518, %v1518
      %v1647 = vpack.c.bf16 %v1519, %v1519
      %v1648 = vpack.c.bf16 %v1520, %v1520
      %v1649 = vpack.c.bf16 %v1521, %v1521
      %v1650 = vpack.c.bf16 %v1522, %v1522
      %v1651 = vpack.c.bf16 %v1523, %v1523
      %v1652 = vpack.c.bf16 %v1524, %v1524
      %v1653 = vpack.c.bf16 %v1525, %v1525
      %v1654 = vpack.c.bf16 %v1526, %v1526
      %v1655 = vpack.c.bf16 %v1527, %v1527
      %v1656 = vpack.c.bf16 %v1528, %v1528
      %v1657 = vpack.c.bf16 %v1529, %v1529
      %v1658 = vpack.c.bf16 %v1530, %v1530
      %v1659 = vpack.c.bf16 %v1531, %v1531
      %v1660 = vpack.c.bf16 %v1532, %v1532
      %v1661 = vpack.c.bf16 %v1533, %v1533
      %v1662 = vpack.c.bf16 %v1534, %v1534
      %v1663 = vpack.c.bf16 %v1535, %v1535
      %v1664 = vpack.c.bf16 %v1536, %v1536
      %v1665 = vpack.c.bf16 %v1537, %v1537
      %v1666 = vpack.c.bf16 %v1538, %v1538
      %v1667 = vpack.c.bf16 %v1539, %v1539
      %v1668 = vpack.c.bf16 %v1540, %v1540
      %v1669 = vpack.c.bf16 %v1541, %v1541
      %v1670 = vpack.c.bf16 %v1542, %v1542
      %v1671 = vpack.c.bf16 %v1543, %v1543
      %v1672 = vpack.c.bf16 %v1544, %v1544
      %v1673 = vpack.c.bf16 %v1545, %v1545
      %v1674 = vpack.c.bf16 %v1546, %v1546
      %v1675 = vpack.c.bf16 %v1547, %v1547
      %v1676 = vpack.c.bf16 %v1548, %v1548
      %v1677 = vpack.c.bf16 %v1549, %v1549
      %v1678 = vpack.c.bf16 %v1550, %v1550
      %v1679 = vpack.c.bf16 %v1551, %v1551
      %v1680 = vpack.c.bf16 %v1552, %v1552
      %v1681 = vpack.c.bf16 %v1553, %v1553
      %v1682 = vpack.c.bf16 %v1554, %v1554
      %v1683 = vpack.c.bf16 %v1555, %v1555
      %v1684 = vpack.c.bf16 %v1556, %v1556
      %v1685 = vpack.c.bf16 %v1557, %v1557
      %v1686 = vpack.c.bf16 %v1558, %v1558
      %v1687 = vpack.c.bf16 %v1559, %v1559
      %v1688 = vpack.c.bf16 %v1560, %v1560
      %v1689 = vpack.c.bf16 %v1561, %v1561
      %v1690 = vpack.c.bf16 %v1562, %v1562
      %v1691 = vpack.c.bf16 %v1563, %v1563
      %v1692 = vpack.c.bf16 %v1564, %v1564
      %v1693 = vpack.c.bf16 %v1565, %v1565
      %v1694 = vpack.c.bf16 %v1566, %v1566
      %v1695 = vpack.c.bf16 %v1567, %v1567
      %v1696 = vpack.c.bf16 %v1568, %v1568
      %v1697 = vpack.c.bf16 %v1569, %v1569
      %v1698 = vpack.c.bf16 %v1570, %v1570
      %v1699 = vpack.c.bf16 %v1571, %v1571
      %v1700 = vpack.c.bf16 %v1572, %v1572
      %v1701 = vpack.c.bf16 %v1573, %v1573
      %v1702 = vpack.c.bf16 %v1574, %v1574
      %v1703 = vpack.c.bf16 %v1575, %v1575
      %v1704 = vpack.c.bf16 %v1576, %v1576
      %v1705 = vpack.c.bf16 %v1577, %v1577
      %v1706 = vpack.c.bf16 %v1578, %v1578
      %v1707 = vpack.c.bf16 %v1579, %v1579
      %v1708 = vpack.c.bf16 %v1580, %v1580
      %v1709 = vpack.c.bf16 %v1581, %v1581
      %v1710 = vpack.c.bf16 %v1582, %v1582
      %v1711 = vpack.c.bf16 %v1583, %v1583
      %v1712 = vpack.c.bf16 %v1584, %v1584
      %v1713 = vpack.c.bf16 %v1585, %v1585
      %vm1714 = vcmask 60416
      %1715 = vst.msk [vmem:[%s199] sm:$0xf] %vm1714, %v1586
      %1716 = vst.msk [vmem:[%s199 + $0x4] sm:$0xf] %vm1714, %v1587
      %1717 = vst.msk [vmem:[%s199 + $0x8] sm:$0xf] %vm1714, %v1588
      %1718 = vst.msk [vmem:[%s199 + $0xc] sm:$0xf] %vm1714, %v1589
      %1719 = vst.msk [vmem:[%s199 + $0x10] sm:$0xf] %vm1714, %v1590
      %1720 = vst.msk [vmem:[%s199 + $0x14] sm:$0xf] %vm1714, %v1591
      %1721 = vst.msk [vmem:[%s199 + $0x18] sm:$0xf] %vm1714, %v1592
      %1722 = vst.msk [vmem:[%s199 + $0x1c] sm:$0xf] %vm1714, %v1593
      %1723 = vst.msk [vmem:[%s199 + $0x20] sm:$0xf] %vm1714, %v1594
      %1724 = vst.msk [vmem:[%s199 + $0x24] sm:$0xf] %vm1714, %v1595
      %1725 = vst.msk [vmem:[%s199 + $0x28] sm:$0xf] %vm1714, %v1596
      %1726 = vst.msk [vmem:[%s199 + $0x2c] sm:$0xf] %vm1714, %v1597
      %1727 = vst.msk [vmem:[%s199 + $0x30] sm:$0xf] %vm1714, %v1598
      %1728 = vst.msk [vmem:[%s199 + $0x34] sm:$0xf] %vm1714, %v1599
      %1729 = vst.msk [vmem:[%s199 + $0x38] sm:$0xf] %vm1714, %v1600
      %1730 = vst.msk [vmem:[%s199 + $0x3c] sm:$0xf] %vm1714, %v1601
      %1731 = vst.msk [vmem:[%s199 + $0x40] sm:$0xf] %vm1714, %v1602
      %1732 = vst.msk [vmem:[%s199 + $0x44] sm:$0xf] %vm1714, %v1603
      %1733 = vst.msk [vmem:[%s199 + $0x48] sm:$0xf] %vm1714, %v1604
      %1734 = vst.msk [vmem:[%s199 + $0x4c] sm:$0xf] %vm1714, %v1605
      %1735 = vst.msk [vmem:[%s199 + $0x50] sm:$0xf] %vm1714, %v1606
      %1736 = vst.msk [vmem:[%s199 + $0x54] sm:$0xf] %vm1714, %v1607
      %1737 = vst.msk [vmem:[%s199 + $0x58] sm:$0xf] %vm1714, %v1608
      %1738 = vst.msk [vmem:[%s199 + $0x5c] sm:$0xf] %vm1714, %v1609
      %1739 = vst.msk [vmem:[%s199 + $0x60] sm:$0xf] %vm1714, %v1610
      %1740 = vst.msk [vmem:[%s199 + $0x64] sm:$0xf] %vm1714, %v1611
      %1741 = vst.msk [vmem:[%s199 + $0x68] sm:$0xf] %vm1714, %v1612
      %1742 = vst.msk [vmem:[%s199 + $0x6c] sm:$0xf] %vm1714, %v1613
      %1743 = vst.msk [vmem:[%s199 + $0x70] sm:$0xf] %vm1714, %v1614
      %1744 = vst.msk [vmem:[%s199 + $0x74] sm:$0xf] %vm1714, %v1615
      %1745 = vst.msk [vmem:[%s199 + $0x78] sm:$0xf] %vm1714, %v1616
      %1746 = vst.msk [vmem:[%s199 + $0x7c] sm:$0xf] %vm1714, %v1617
      %1747 = vst.msk [vmem:[%s199 + $0x80] sm:$0xf] %vm1714, %v1618
      %1748 = vst.msk [vmem:[%s199 + $0x84] sm:$0xf] %vm1714, %v1619
      %1749 = vst.msk [vmem:[%s199 + $0x88] sm:$0xf] %vm1714, %v1620
      %1750 = vst.msk [vmem:[%s199 + $0x8c] sm:$0xf] %vm1714, %v1621
      %1751 = vst.msk [vmem:[%s199 + $0x90] sm:$0xf] %vm1714, %v1622
      %1752 = vst.msk [vmem:[%s199 + $0x94] sm:$0xf] %vm1714, %v1623
      %1753 = vst.msk [vmem:[%s199 + $0x98] sm:$0xf] %vm1714, %v1624
      %1754 = vst.msk [vmem:[%s199 + $0x9c] sm:$0xf] %vm1714, %v1625
      %1755 = vst.msk [vmem:[%s199 + $0xa0] sm:$0xf] %vm1714, %v1626
      %1756 = vst.msk [vmem:[%s199 + $0xa4] sm:$0xf] %vm1714, %v1627
      %1757 = vst.msk [vmem:[%s199 + $0xa8] sm:$0xf] %vm1714, %v1628
      %1758 = vst.msk [vmem:[%s199 + $0xac] sm:$0xf] %vm1714, %v1629
      %1759 = vst.msk [vmem:[%s199 + $0xb0] sm:$0xf] %vm1714, %v1630
      %1760 = vst.msk [vmem:[%s199 + $0xb4] sm:$0xf] %vm1714, %v1631
      %1761 = vst.msk [vmem:[%s199 + $0xb8] sm:$0xf] %vm1714, %v1632
      %1762 = vst.msk [vmem:[%s199 + $0xbc] sm:$0xf] %vm1714, %v1633
      %1763 = vst.msk [vmem:[%s199 + $0xc0] sm:$0xf] %vm1714, %v1634
      %1764 = vst.msk [vmem:[%s199 + $0xc4] sm:$0xf] %vm1714, %v1635
      %1765 = vst.msk [vmem:[%s199 + $0xc8] sm:$0xf] %vm1714, %v1636
      %1766 = vst.msk [vmem:[%s199 + $0xcc] sm:$0xf] %vm1714, %v1637
      %1767 = vst.msk [vmem:[%s199 + $0xd0] sm:$0xf] %vm1714, %v1638
      %1768 = vst.msk [vmem:[%s199 + $0xd4] sm:$0xf] %vm1714, %v1639
      %1769 = vst.msk [vmem:[%s199 + $0xd8] sm:$0xf] %vm1714, %v1640
      %1770 = vst.msk [vmem:[%s199 + $0xdc] sm:$0xf] %vm1714, %v1641
      %1771 = vst.msk [vmem:[%s199 + $0xe0] sm:$0xf] %vm1714, %v1642
      %1772 = vst.msk [vmem:[%s199 + $0xe4] sm:$0xf] %vm1714, %v1643
      %1773 = vst.msk [vmem:[%s199 + $0xe8] sm:$0xf] %vm1714, %v1644
      %1774 = vst.msk [vmem:[%s199 + $0xec] sm:$0xf] %vm1714, %v1645
      %1775 = vst.msk [vmem:[%s199 + $0xf0] sm:$0xf] %vm1714, %v1646
      %1776 = vst.msk [vmem:[%s199 + $0xf4] sm:$0xf] %vm1714, %v1647
      %1777 = vst.msk [vmem:[%s199 + $0xf8] sm:$0xf] %vm1714, %v1648
      %1778 = vst.msk [vmem:[%s199 + $0xfc] sm:$0xf] %vm1714, %v1649
      %1779 = vst.msk [vmem:[%s199 + $0x100] sm:$0xf] %vm1714, %v1650
      %1780 = vst.msk [vmem:[%s199 + $0x104] sm:$0xf] %vm1714, %v1651
      %1781 = vst.msk [vmem:[%s199 + $0x108] sm:$0xf] %vm1714, %v1652
      %1782 = vst.msk [vmem:[%s199 + $0x10c] sm:$0xf] %vm1714, %v1653
      %1783 = vst.msk [vmem:[%s199 + $0x110] sm:$0xf] %vm1714, %v1654
      %1784 = vst.msk [vmem:[%s199 + $0x114] sm:$0xf] %vm1714, %v1655
      %1785 = vst.msk [vmem:[%s199 + $0x118] sm:$0xf] %vm1714, %v1656
      %1786 = vst.msk [vmem:[%s199 + $0x11c] sm:$0xf] %vm1714, %v1657
      %1787 = vst.msk [vmem:[%s199 + $0x120] sm:$0xf] %vm1714, %v1658
      %1788 = vst.msk [vmem:[%s199 + $0x124] sm:$0xf] %vm1714, %v1659
      %1789 = vst.msk [vmem:[%s199 + $0x128] sm:$0xf] %vm1714, %v1660
      %1790 = vst.msk [vmem:[%s199 + $0x12c] sm:$0xf] %vm1714, %v1661
      %1791 = vst.msk [vmem:[%s199 + $0x130] sm:$0xf] %vm1714, %v1662
      %1792 = vst.msk [vmem:[%s199 + $0x134] sm:$0xf] %vm1714, %v1663
      %1793 = vst.msk [vmem:[%s199 + $0x138] sm:$0xf] %vm1714, %v1664
      %1794 = vst.msk [vmem:[%s199 + $0x13c] sm:$0xf] %vm1714, %v1665
      %1795 = vst.msk [vmem:[%s199 + $0x140] sm:$0xf] %vm1714, %v1666
      %1796 = vst.msk [vmem:[%s199 + $0x144] sm:$0xf] %vm1714, %v1667
      %1797 = vst.msk [vmem:[%s199 + $0x148] sm:$0xf] %vm1714, %v1668
      %1798 = vst.msk [vmem:[%s199 + $0x14c] sm:$0xf] %vm1714, %v1669
      %1799 = vst.msk [vmem:[%s199 + $0x150] sm:$0xf] %vm1714, %v1670
      %1800 = vst.msk [vmem:[%s199 + $0x154] sm:$0xf] %vm1714, %v1671
      %1801 = vst.msk [vmem:[%s199 + $0x158] sm:$0xf] %vm1714, %v1672
      %1802 = vst.msk [vmem:[%s199 + $0x15c] sm:$0xf] %vm1714, %v1673
      %1803 = vst.msk [vmem:[%s199 + $0x160] sm:$0xf] %vm1714, %v1674
      %1804 = vst.msk [vmem:[%s199 + $0x164] sm:$0xf] %vm1714, %v1675
      %1805 = vst.msk [vmem:[%s199 + $0x168] sm:$0xf] %vm1714, %v1676
      %1806 = vst.msk [vmem:[%s199 + $0x16c] sm:$0xf] %vm1714, %v1677
      %1807 = vst.msk [vmem:[%s199 + $0x170] sm:$0xf] %vm1714, %v1678
      %1808 = vst.msk [vmem:[%s199 + $0x174] sm:$0xf] %vm1714, %v1679
      %1809 = vst.msk [vmem:[%s199 + $0x178] sm:$0xf] %vm1714, %v1680
      %1810 = vst.msk [vmem:[%s199 + $0x17c] sm:$0xf] %vm1714, %v1681
      %1811 = vst.msk [vmem:[%s199 + $0x180] sm:$0xf] %vm1714, %v1682
      %1812 = vst.msk [vmem:[%s199 + $0x184] sm:$0xf] %vm1714, %v1683
      %1813 = vst.msk [vmem:[%s199 + $0x188] sm:$0xf] %vm1714, %v1684
      %1814 = vst.msk [vmem:[%s199 + $0x18c] sm:$0xf] %vm1714, %v1685
      %1815 = vst.msk [vmem:[%s199 + $0x190] sm:$0xf] %vm1714, %v1686
      %1816 = vst.msk [vmem:[%s199 + $0x194] sm:$0xf] %vm1714, %v1687
      %1817 = vst.msk [vmem:[%s199 + $0x198] sm:$0xf] %vm1714, %v1688
      %1818 = vst.msk [vmem:[%s199 + $0x19c] sm:$0xf] %vm1714, %v1689
      %1819 = vst.msk [vmem:[%s199 + $0x1a0] sm:$0xf] %vm1714, %v1690
      %1820 = vst.msk [vmem:[%s199 + $0x1a4] sm:$0xf] %vm1714, %v1691
      %1821 = vst.msk [vmem:[%s199 + $0x1a8] sm:$0xf] %vm1714, %v1692
      %1822 = vst.msk [vmem:[%s199 + $0x1ac] sm:$0xf] %vm1714, %v1693
      %1823 = vst.msk [vmem:[%s199 + $0x1b0] sm:$0xf] %vm1714, %v1694
      %1824 = vst.msk [vmem:[%s199 + $0x1b4] sm:$0xf] %vm1714, %v1695
      %1825 = vst.msk [vmem:[%s199 + $0x1b8] sm:$0xf] %vm1714, %v1696
      %1826 = vst.msk [vmem:[%s199 + $0x1bc] sm:$0xf] %vm1714, %v1697
      %1827 = vst.msk [vmem:[%s199 + $0x1c0] sm:$0xf] %vm1714, %v1698
      %1828 = vst.msk [vmem:[%s199 + $0x1c4] sm:$0xf] %vm1714, %v1699
      %1829 = vst.msk [vmem:[%s199 + $0x1c8] sm:$0xf] %vm1714, %v1700
      %1830 = vst.msk [vmem:[%s199 + $0x1cc] sm:$0xf] %vm1714, %v1701
      %1831 = vst.msk [vmem:[%s199 + $0x1d0] sm:$0xf] %vm1714, %v1702
      %1832 = vst.msk [vmem:[%s199 + $0x1d4] sm:$0xf] %vm1714, %v1703
      %1833 = vst.msk [vmem:[%s199 + $0x1d8] sm:$0xf] %vm1714, %v1704
      %1834 = vst.msk [vmem:[%s199 + $0x1dc] sm:$0xf] %vm1714, %v1705
      %1835 = vst.msk [vmem:[%s199 + $0x1e0] sm:$0xf] %vm1714, %v1706
      %1836 = vst.msk [vmem:[%s199 + $0x1e4] sm:$0xf] %vm1714, %v1707
      %1837 = vst.msk [vmem:[%s199 + $0x1e8] sm:$0xf] %vm1714, %v1708
      %1838 = vst.msk [vmem:[%s199 + $0x1ec] sm:$0xf] %vm1714, %v1709
      %1839 = vst.msk [vmem:[%s199 + $0x1f0] sm:$0xf] %vm1714, %v1710
      %1840 = vst.msk [vmem:[%s199 + $0x1f4] sm:$0xf] %vm1714, %v1711
      %1841 = vst.msk [vmem:[%s199 + $0x1f8] sm:$0xf] %vm1714, %v1712
      %1842 = vst.msk [vmem:[%s199 + $0x1fc] sm:$0xf] %vm1714, %v1713
      %s1843 = smul.u32 128, %s15
      %p1844 = scmp.lt.s32.totalorder %s1843, 1023
      %s1845 = scalar_select %p1844, %s1843, 1023
      %s1846 = smul.addr %s1845, 4
      %s1847 = scalar_lea.vmem %s4, %s1846
      // Predicated region
      $region37: #{tpu_custom_call.1} parent=35 // pred_check
        %p1848 = pneg %p122
      $region38: #{tpu_custom_call.1} parent=35 // pred_check_branch
        %1850 = sbr.rel (%p1848) target = $region40
      $region39: #{tpu_custom_call.1} parent=35 // pred_region
        %s1851 = smul.u32 128, %s15
      $region40: #{tpu_custom_call.1} parent=35 // pred_fallthru
        _
    $region36: #{tpu_custom_call.1} parent=5 // pred_fallthru
      _
    %p1852 = scmp.le.s32.totalorder 2, %s10
    // Predicated region
    $region41: #{tpu_custom_call.1} parent=5 // pred_check
      %p1853 = pneg %p1852
    $region42: #{tpu_custom_call.1} parent=5 // pred_check_branch
      %1855 = sbr.rel (%p1853) target = $region44
    $region43: #{tpu_custom_call.1} parent=5 // pred_region
      %s1856 = ssub.s32 %s10, 2
      // Predicated region
      $region45: #{tpu_custom_call.1} parent=43 // pred_check
        %p1857 = pneg %p128
      $region46: #{tpu_custom_call.1} parent=43 // pred_check_branch
        %1859 = sbr.rel (%p1857) target = $region48
      $region47: #{tpu_custom_call.1} parent=43 // pred_region
        %s1860 = smul.u32 128, %s16
        %p1861 = scmp.lt.s32.totalorder %s1860, 1023
        %s1862 = scalar_select %p1861, %s1860, 1023
        %s1863 = smul.addr %s1862, 4
        %s1864 = scalar_lea.vmem %s4, %s1863
      $region48: #{tpu_custom_call.1} parent=43 // pred_fallthru
        _
    $region44: #{tpu_custom_call.1} parent=5 // pred_fallthru
      _
  $region6: #{tpu_custom_call.1} parent=0 // loop_footer
    %s14 = sadd.s32 1, %s10
  $region7: #{tpu_custom_call.1} parent=0 // loop_footer_branch
    %9 = sbr.rel target = $region3
  $region8: #{tpu_custom_call.1} parent=0 // loop_exit
    _

</llo_original>
